<compile_context>
chip_gen: v6e
topology: v6e:2x2x1
jax: 0.10.0
libtpu: 0.0.40
codegen_flags: <defaults>
</compile_context>

<pallas_src>
import functools
import numpy as np
import jax
import jax.numpy as jnp
from jax.experimental import pallas as pl
from jax.experimental.pallas import tpu as pltpu


def _resnet_block_cond_kernel(xp_ref, cond_ref, wconv_ref, pp_ref, mask_ref,
                              out_ref, *, wp, bt):
    """One grid step = `bt` images, each in lane-dense (C, Np_pad) layout."""
    c3 = wconv_ref.shape[1]                 # 3*C
    C = c3 // 3
    np_pad = xp_ref.shape[2]

    mask = mask_ref[...].astype(jnp.float32)          # (1, Np_pad): 1 on interior
    pp = pp_ref[...].astype(jnp.float32)              # (C, 128) packed params
    gn_ind = pp[:, :C]                                 # 0/1 group-membership matrix
    g2 = pp[:, C:C + 1]
    b2 = pp[:, C + 1:C + 2]

    # 1 / (group_size * H * W), derived from the mask (H/W not baked in).
    cnt = jnp.sum(mask, axis=1, keepdims=True)         # (1, 1) = H*W
    inv_gcnt = 1.0 / (4.0 * cnt)

    w1 = wconv_ref[0]                                  # (3C, 3C) bf16, rows = kw*C+co
    w2 = wconv_ref[1]

    def conv3x3(src, w_bf16):
        """3x3 'same' conv of a zero-bordered (C, Np_pad) image.

        Row taps: 2 lane-rolls of the input build a (3C, Np) slab; one bf16 MXU
        matmul produces the three column-tap partials stacked on sublanes; the
        +-1 column taps are 2 lane-rolls of the partial outputs.  Roll wrap
        junk only lands on border/tail lanes, which are masked before use.
        """
        slab = jnp.concatenate(
            [pltpu.roll(src, shift=wp, axis=1),               # kh=0 (dh=-1)
             src,                                             # kh=1
             pltpu.roll(src, shift=np_pad - wp, axis=1)],     # kh=2 (dh=+1)
            axis=0).astype(jnp.bfloat16)                      # (3C, Np_pad)
        p = jnp.dot(w_bf16, slab, preferred_element_type=jnp.float32)
        return (pltpu.roll(p[0:C], shift=1, axis=1)           # kw=0 (dw=-1)
                + p[C:2 * C]                                   # kw=1
                + pltpu.roll(p[2 * C:3 * C], shift=np_pad - 1, axis=1))  # kw=2

    def gn_stats(h):
        """Per-group mean / inv-std of a masked (zero outside interior) map."""
        s = jnp.sum(h, axis=1, keepdims=True)                           # (C, 1)
        mean = jnp.dot(gn_ind, s, preferred_element_type=jnp.float32) * inv_gcnt
        hc = (h - mean) * mask
        v = jnp.sum(hc * hc, axis=1, keepdims=True)
        var = jnp.dot(gn_ind, v, preferred_element_type=jnp.float32) * inv_gcnt
        return mean, jax.lax.rsqrt(var + 1e-5)

    for i in range(bt):            # small static batch tile, weights held live
        xp = xp_ref[i].astype(jnp.float32)                  # (C, Np_pad)
        cnd = cond_ref[i].astype(jnp.float32)               # (C, 128)
        t_emb = cnd[:, 0:1]
        scale1 = cnd[:, 1:2]       # = gamma_ada * gn1_weight      (wrapper-fused)
        shift1 = cnd[:, 2:3]       # = gamma_ada * gn1_bias + beta_ada

        # conv1 + Dense_time; zero border/tail so GN stats see only the interior.
        h = (conv3x3(xp, w1) + t_emb) * mask
        mean1, inv1 = gn_stats(h)
        a1 = inv1 * scale1
        c1 = shift1 - mean1 * a1
        # GroupNorm1 + AdaptiveLayer (folded) + ReLU; re-mask -> conv2 zero border.
        h = jnp.maximum(h * a1 + c1, 0.0) * mask

        # conv2 + GroupNorm2 + residual (border lanes hold junk; wrapper slices).
        h2 = conv3x3(h, w2) * mask
        mean2, inv2 = gn_stats(h2)
        a2 = inv2 * g2
        c2 = b2 - mean2 * a2
        out_ref[i] = (xp + h2 * a2 + c2).astype(out_ref.dtype)


def resnet_block_cond(x_nchw, time_cond, z, params, *, batch_tile=None):
    """x_nchw: (B,C,H,W) f32 ; time_cond: (B,temb) ; z: (B,z_dim)."""
    B, C, H, W = x_nchw.shape
    assert C % 8 == 0, "C must be a multiple of 8 (sublane tile / group math)"
    Hp, Wp = H + 2, W + 2
    Np = Hp * Wp
    Np_pad = ((Np + 127) // 128) * 128

    if batch_tile is None:
        batch_tile = 1
        for t in (8, 4, 2):
            if B % t == 0 and B // t >= 2:   # keep >=2 grid steps for megacore
                batch_tile = t
                break
    assert B % batch_tile == 0

    # --- conditioning: one tiny batched XLA GEMM + the AdaptiveLayer fold ---
    cv = jnp.concatenate([time_cond, z], axis=1) @ params["wc"] + params["bc"]
    t_emb, gamma_a, beta_a = cv[:, :C], cv[:, C:2 * C], cv[:, 2 * C:]
    scale1 = gamma_a * params["g1"][None, :]
    shift1 = gamma_a * params["b1"][None, :] + beta_a
    cond = jnp.stack([t_emb, scale1, shift1], axis=-1)          # (B, C, 3)
    cond = jnp.pad(cond, ((0, 0), (0, 0), (0, 128 - 3)))         # lane-dense operand

    # --- glue (no transposes): zero halo, flatten, pad lanes to 128-multiple ---
    # TODO(synk): at production sizes this pad (and the final slice) is an extra
    # HBM round trip; fold it into the kernel (matters most on v7x).
    xp = jnp.pad(x_nchw, ((0, 0), (0, 0), (1, 1), (1, 1))).reshape(B, C, Np)
    xp = jnp.pad(xp, ((0, 0), (0, 0), (0, Np_pad - Np)))

    kernel = functools.partial(_resnet_block_cond_kernel, wp=Wp, bt=batch_tile)
    out = pl.pallas_call(
        kernel,
        out_shape=jax.ShapeDtypeStruct((B, C, Np_pad), x_nchw.dtype),
        grid=(B // batch_tile,),
        in_specs=[
            pl.BlockSpec((batch_tile, C, Np_pad), lambda g: (g, 0, 0)),  # images
            pl.BlockSpec((batch_tile, C, 128), lambda g: (g, 0, 0)),     # cond cols
            pl.BlockSpec((2, 3 * C, 3 * C), lambda g: (0, 0, 0)),        # conv weights
            pl.BlockSpec((C, 128), lambda g: (0, 0)),                    # gn_ind|g2|b2
            pl.BlockSpec((1, Np_pad), lambda g: (0, 0)),                 # interior mask
        ],
        out_specs=pl.BlockSpec((batch_tile, C, Np_pad), lambda g: (g, 0, 0)),
        compiler_params=pltpu.CompilerParams(
            dimension_semantics=("parallel",)),
    )(xp, cond, params["wconv"], params["pp"], params["mask"])

    # Lane-dense output -> NCHW with only slice + reshape (no transpose).
    return out[:, :, :Np].reshape(B, C, Hp, Wp)[:, :, 1:1 + H, 1:1 + W]


def pack_params(torch_params, H, W):
    """PyTorch-layout parameters -> fused kernel / wrapper operands."""
    (w_time, b_time, w1_oihw, w2_oihw, g1, b1, ws, bs, g2, b2) = torch_params
    C = w1_oihw.shape[0]
    temb = w_time.shape[1]
    zd = ws.shape[1]
    assert C % 8 == 0 and C % 4 == 0

    # Conv weights in bf16 for the MXU: rows = kw*C + cout, cols = kh*C + cin.
    def conv_pack(w):
        return jnp.transpose(w, (3, 0, 2, 1)).reshape(3 * C, 3 * C)
    wconv = jnp.stack([conv_pack(w1_oihw), conv_pack(w2_oihw)]).astype(jnp.bfloat16)

    # Group-membership indicator + GroupNorm2 affine, lane-padded to 128.
    gid = np.arange(C) // 4
    pp = np.zeros((C, 128), np.float32)
    pp[:, :C] = (gid[:, None] == gid[None, :]).astype(np.float32)
    pp[:, C] = np.asarray(g2)
    pp[:, C + 1] = np.asarray(b2)

    # Interior mask over the padded, flattened, lane-padded spatial axis.
    Hp, Wp = H + 2, W + 2
    Np = Hp * Wp
    Np_pad = ((Np + 127) // 128) * 128
    m2d = np.zeros((Hp, Wp), np.float32)
    m2d[1:1 + H, 1:1 + W] = 1.0
    mask = np.pad(m2d.reshape(1, Np), ((0, 0), (0, Np_pad - Np)))

    # Fused conditioning GEMM (done batched in the wrapper, not the kernel):
    # [time_cond | z] @ wc + bc = [Dense_time(t) | gamma_ada | beta_ada].
    wc = np.zeros((temb + zd, 3 * C), np.float32)
    wc[:temb, 0:C] = np.asarray(w_time).T
    wc[temb:, C:2 * C] = np.asarray(ws)[:C].T
    wc[temb:, 2 * C:3 * C] = np.asarray(ws)[C:].T
    bc = np.concatenate([np.asarray(b_time), np.asarray(bs)])

    return dict(wconv=wconv, pp=jnp.asarray(pp), mask=jnp.asarray(mask),
                wc=jnp.asarray(wc), bc=jnp.asarray(bc),
                g1=jnp.asarray(g1), b1=jnp.asarray(b1))


def reference(x, tcond, z, torch_params):
    """Pure-JAX f32 reference mirroring the PyTorch module (NCHW)."""
    (w_time, b_time, w1_oihw, w2_oihw, g1, b1, ws, bs, g2, b2) = torch_params
    C = x.shape[1]
    G = C // 4

    def conv(a, w):
        return jax.lax.conv_general_dilated(
            a, w, (1, 1), ((1, 1), (1, 1)),
            dimension_numbers=("NCHW", "OIHW", "NCHW"))

    def gn(h, gamma, beta):
        Bn, Cc, Hh, Ww = h.shape
        hg = h.reshape(Bn, G, Cc // G, Hh, Ww)
        mu = hg.mean(axis=(2, 3, 4), keepdims=True)
        var = ((hg - mu) ** 2).mean(axis=(2, 3, 4), keepdims=True)
        hn = ((hg - mu) / jnp.sqrt(var + 1e-5)).reshape(Bn, Cc, Hh, Ww)
        return hn * gamma.reshape(1, Cc, 1, 1) + beta.reshape(1, Cc, 1, 1)

    t = tcond @ w_time.T + b_time                        # Dense_time
    h = conv(x, w1_oihw) + t[:, :, None, None]
    h = gn(h, g1, b1)
    s = z @ ws.T + bs                                    # AdaptiveLayer.style_net
    gamma_a, beta_a = s[:, :C], s[:, C:]
    h = gamma_a[:, :, None, None] * h + beta_a[:, :, None, None]
    h = jnp.maximum(h, 0.0)
    h = conv(h, w2_oihw)
    h = gn(h, g2, b2)
    return x + h


if __name__ == "__main__":
    B, C, H, W = 4, 8, 16, 16          # dim=8 (divisible by 4 for GroupNorm)
    temb_dim, z_dim = 32, 16

    key = jax.random.PRNGKey(0)
    ks = jax.random.split(key, 7)
    x = jax.random.normal(ks[0], (B, C, H, W), jnp.float32)
    time_cond = jax.random.normal(ks[1], (B, temb_dim), jnp.float32)
    z = jax.random.normal(ks[2], (B, z_dim), jnp.float32)

    # --- deterministic parameters (shapes/inits from module __init__) ---
    w_time = jax.random.normal(ks[3], (C, temb_dim), jnp.float32) * 0.1   # Dense_time.weight
    b_time = jnp.zeros((C,), jnp.float32)                                 # Dense_time.bias = 0
    w1_oihw = jax.random.normal(ks[4], (C, C, 3, 3), jnp.float32) * 0.1
    w2_oihw = jax.random.normal(ks[5], (C, C, 3, 3), jnp.float32) * 0.1
    g1 = jnp.ones((C,), jnp.float32); b1 = jnp.zeros((C,), jnp.float32)
    g2 = jnp.ones((C,), jnp.float32); b2 = jnp.zeros((C,), jnp.float32)
    ws = jax.random.normal(ks[6], (2 * C, z_dim), jnp.float32) * 0.1      # style_net.weight
    bs = jnp.concatenate([jnp.ones((C,)), jnp.zeros((C,))]).astype(jnp.float32)

    torch_params = (w_time, b_time, w1_oihw, w2_oihw, g1, b1, ws, bs, g2, b2)
    params = pack_params(torch_params, H, W)

    out = jax.block_until_ready(resnet_block_cond(x, time_cond, z, params))
    ref = jax.block_until_ready(reference(x, time_cond, z, torch_params))

    assert out.shape == (B, C, H, W)
    # Tolerance reflects bf16 MXU operands (f32 accumulation); a structurally
    # wrong kernel produces O(1) errors, far outside this bound.
    np.testing.assert_allclose(np.asarray(out), np.asarray(ref),
                               atol=2e-2, rtol=2e-2)
    print("KERNEL_OK")
</pallas_src>

<mosaic_0001>
module attributes {stable_mosaic.version = 11 : i64} {
  func.func @_resnet_block_cond_kernel(%arg0: i32, %arg1: memref<2x8x384xf32, #tpu.memory_space<vmem>>, %arg2: memref<2x8x128xf32, #tpu.memory_space<vmem>>, %arg3: memref<2x24x24xbf16, #tpu.memory_space<vmem>>, %arg4: memref<8x128xf32, #tpu.memory_space<vmem>>, %arg5: memref<1x384xf32, #tpu.memory_space<vmem>>, %arg6: memref<2x8x384xf32, #tpu.memory_space<vmem>>) attributes {dimension_semantics = [#tpu.dimension_semantics<parallel>], iteration_bounds = array<i64: 2>, scalar_prefetch = 0 : i64, scratch_operands = 0 : i64, tpu.core_type = #tpu.core_type<tc>, window_params = [{transform_indices = @transform_0, window_bounds = array<i64: 2, 8, 384>}, {transform_indices = @transform_1, window_bounds = array<i64: 2, 8, 128>}, {pipeline_mode = #tpu.pipeline_mode<synchronous>, transform_indices = @transform_2, window_bounds = array<i64: 2, 24, 24>}, {pipeline_mode = #tpu.pipeline_mode<synchronous>, transform_indices = @transform_3, window_bounds = array<i64: 8, 128>}, {pipeline_mode = #tpu.pipeline_mode<synchronous>, transform_indices = @transform_4, window_bounds = array<i64: 1, 384>}, {transform_indices = @transform_5, window_bounds = array<i64: 2, 8, 384>}]} {
    %c0 = arith.constant 0 : index
    %c0_0 = arith.constant 0 : index
    %0 = vector.load %arg5[%c0, %c0_0] : memref<1x384xf32, #tpu.memory_space<vmem>>, vector<1x384xf32>
    %c0_1 = arith.constant 0 : index
    %c0_2 = arith.constant 0 : index
    %1 = vector.load %arg4[%c0_1, %c0_2] : memref<8x128xf32, #tpu.memory_space<vmem>>, vector<8x128xf32>
    %2 = vector.extract_strided_slice %1 {offsets = [0, 0], sizes = [8, 8], strides = [1, 1]} : vector<8x128xf32> to vector<8x8xf32>
    %3 = vector.extract_strided_slice %1 {offsets = [0, 8], sizes = [8, 1], strides = [1, 1]} : vector<8x128xf32> to vector<8x1xf32>
    %4 = vector.extract_strided_slice %1 {offsets = [0, 9], sizes = [8, 1], strides = [1, 1]} : vector<8x128xf32> to vector<8x1xf32>
    %cst = arith.constant dense<0.000000e+00> : vector<1xf32>
    %5 = vector.multi_reduction <add>, %0, %cst [1] : vector<1x384xf32> to vector<1xf32>
    %6 = vector.shape_cast %5 : vector<1xf32> to vector<1x1xf32>
    %cst_3 = arith.constant 4.000000e+00 : f32
    %7 = vector.broadcast %cst_3 : f32 to vector<1x1xf32>
    %8 = arith.mulf %7, %6 : vector<1x1xf32>
    %cst_4 = arith.constant 1.000000e+00 : f32
    %9 = vector.broadcast %cst_4 : f32 to vector<1x1xf32>
    %10 = arith.divf %9, %8 : vector<1x1xf32>
    %c0_5 = arith.constant 0 : index
    %c0_6 = arith.constant 0 : index
    %c0_7 = arith.constant 0 : index
    %11 = vector.load %arg3[%c0_5, %c0_6, %c0_7] : memref<2x24x24xbf16, #tpu.memory_space<vmem>>, vector<1x24x24xbf16>
    %12 = vector.shape_cast %11 : vector<1x24x24xbf16> to vector<24x24xbf16>
    %c1 = arith.constant 1 : index
    %c0_8 = arith.constant 0 : index
    %c0_9 = arith.constant 0 : index
    %13 = vector.load %arg3[%c1, %c0_8, %c0_9] : memref<2x24x24xbf16, #tpu.memory_space<vmem>>, vector<1x24x24xbf16>
    %14 = vector.shape_cast %13 : vector<1x24x24xbf16> to vector<24x24xbf16>
    %c0_10 = arith.constant 0 : index
    %c0_11 = arith.constant 0 : index
    %c0_12 = arith.constant 0 : index
    %15 = vector.load %arg1[%c0_10, %c0_11, %c0_12] : memref<2x8x384xf32, #tpu.memory_space<vmem>>, vector<1x8x384xf32>
    %16 = vector.shape_cast %15 : vector<1x8x384xf32> to vector<8x384xf32>
    %c0_13 = arith.constant 0 : index
    %c0_14 = arith.constant 0 : index
    %c0_15 = arith.constant 0 : index
    %17 = vector.load %arg2[%c0_13, %c0_14, %c0_15] : memref<2x8x128xf32, #tpu.memory_space<vmem>>, vector<1x8x128xf32>
    %18 = vector.shape_cast %17 : vector<1x8x128xf32> to vector<8x128xf32>
    %19 = vector.extract_strided_slice %18 {offsets = [0, 0], sizes = [8, 1], strides = [1, 1]} : vector<8x128xf32> to vector<8x1xf32>
    %20 = vector.extract_strided_slice %18 {offsets = [0, 1], sizes = [8, 1], strides = [1, 1]} : vector<8x128xf32> to vector<8x1xf32>
    %21 = vector.extract_strided_slice %18 {offsets = [0, 2], sizes = [8, 1], strides = [1, 1]} : vector<8x128xf32> to vector<8x1xf32>
    %c18_i32 = arith.constant 18 : i32
    %22 = tpu.dynamic_rotate %16 by %c18_i32 dim 1 : vector<8x384xf32>, i32 -> vector<8x384xf32>
    %c366_i32 = arith.constant 366 : i32
    %23 = tpu.dynamic_rotate %16 by %c366_i32 dim 1 : vector<8x384xf32>, i32 -> vector<8x384xf32>
    %24 = tpu.concatenate %22, %16, %23 in 0 : vector<8x384xf32>, vector<8x384xf32>, vector<8x384xf32> -> vector<24x384xf32>
    %25 = arith.truncf %24 : vector<24x384xf32> to vector<24x384xbf16>
    %cst_16 = arith.constant dense<0.000000e+00> : vector<24x384xf32>
    %26 = tpu.matmul %12, %25, %cst_16 {dimension_numbers = #tpu.dot_dimension_numbers<[1], [0], [0], [1], [0, 0, 1, 1], [], []>} : vector<24x24xbf16>, vector<24x384xbf16>, vector<24x384xf32> -> vector<24x384xf32>
    %27 = vector.extract_strided_slice %26 {offsets = [0, 0], sizes = [8, 384], strides = [1, 1]} : vector<24x384xf32> to vector<8x384xf32>
    %c1_i32 = arith.constant 1 : i32
    %28 = tpu.dynamic_rotate %27 by %c1_i32 dim 1 : vector<8x384xf32>, i32 -> vector<8x384xf32>
    %29 = vector.extract_strided_slice %26 {offsets = [8, 0], sizes = [8, 384], strides = [1, 1]} : vector<24x384xf32> to vector<8x384xf32>
    %30 = arith.addf %28, %29 : vector<8x384xf32>
    %31 = vector.extract_strided_slice %26 {offsets = [16, 0], sizes = [8, 384], strides = [1, 1]} : vector<24x384xf32> to vector<8x384xf32>
    %c383_i32 = arith.constant 383 : i32
    %32 = tpu.dynamic_rotate %31 by %c383_i32 dim 1 : vector<8x384xf32>, i32 -> vector<8x384xf32>
    %33 = arith.addf %30, %32 : vector<8x384xf32>
    %34 = vector.broadcast %19 : vector<8x1xf32> to vector<8x384xf32>
    %35 = arith.addf %33, %34 : vector<8x384xf32>
    %36 = vector.broadcast %0 : vector<1x384xf32> to vector<8x384xf32>
    %37 = arith.mulf %35, %36 : vector<8x384xf32>
    %cst_17 = arith.constant dense<0.000000e+00> : vector<8xf32>
    %38 = vector.multi_reduction <add>, %37, %cst_17 [1] : vector<8x384xf32> to vector<8xf32>
    %39 = vector.shape_cast %38 : vector<8xf32> to vector<8x1xf32>
    %cst_18 = arith.constant dense<0.000000e+00> : vector<8x1xf32>
    %40 = tpu.matmul %2, %39, %cst_18 {dimension_numbers = #tpu.dot_dimension_numbers<[1], [0], [0], [1], [0, 0, 1, 1], [], []>} : vector<8x8xf32>, vector<8x1xf32>, vector<8x1xf32> -> vector<8x1xf32>
    %41 = vector.broadcast %10 : vector<1x1xf32> to vector<8x1xf32>
    %42 = arith.mulf %40, %41 : vector<8x1xf32>
    %43 = vector.broadcast %42 : vector<8x1xf32> to vector<8x384xf32>
    %44 = arith.subf %37, %43 : vector<8x384xf32>
    %45 = vector.broadcast %0 : vector<1x384xf32> to vector<8x384xf32>
    %46 = arith.mulf %44, %45 : vector<8x384xf32>
    %47 = arith.mulf %46, %46 : vector<8x384xf32>
    %cst_19 = arith.constant dense<0.000000e+00> : vector<8xf32>
    %48 = vector.multi_reduction <add>, %47, %cst_19 [1] : vector<8x384xf32> to vector<8xf32>
    %49 = vector.shape_cast %48 : vector<8xf32> to vector<8x1xf32>
    %cst_20 = arith.constant dense<0.000000e+00> : vector<8x1xf32>
    %50 = tpu.matmul %2, %49, %cst_20 {dimension_numbers = #tpu.dot_dimension_numbers<[1], [0], [0], [1], [0, 0, 1, 1], [], []>} : vector<8x8xf32>, vector<8x1xf32>, vector<8x1xf32> -> vector<8x1xf32>
    %51 = vector.broadcast %10 : vector<1x1xf32> to vector<8x1xf32>
    %52 = arith.mulf %50, %51 : vector<8x1xf32>
    %cst_21 = arith.constant 9.99999974E-6 : f32
    %53 = vector.broadcast %cst_21 : f32 to vector<8x1xf32>
    %54 = arith.addf %52, %53 : vector<8x1xf32>
    %55 = math.rsqrt %54 : vector<8x1xf32>
    %56 = arith.mulf %55, %20 : vector<8x1xf32>
    %57 = arith.mulf %42, %56 : vector<8x1xf32>
    %58 = arith.subf %21, %57 : vector<8x1xf32>
    %59 = vector.broadcast %56 : vector<8x1xf32> to vector<8x384xf32>
    %60 = arith.mulf %37, %59 : vector<8x384xf32>
    %61 = vector.broadcast %58 : vector<8x1xf32> to vector<8x384xf32>
    %62 = arith.addf %60, %61 : vector<8x384xf32>
    %cst_22 = arith.constant 0.000000e+00 : f32
    %63 = vector.broadcast %cst_22 : f32 to vector<8x384xf32>
    %64 = arith.maximumf %62, %63 : vector<8x384xf32>
    %65 = vector.broadcast %0 : vector<1x384xf32> to vector<8x384xf32>
    %66 = arith.mulf %64, %65 : vector<8x384xf32>
    %c18_i32_23 = arith.constant 18 : i32
    %67 = tpu.dynamic_rotate %66 by %c18_i32_23 dim 1 : vector<8x384xf32>, i32 -> vector<8x384xf32>
    %c366_i32_24 = arith.constant 366 : i32
    %68 = tpu.dynamic_rotate %66 by %c366_i32_24 dim 1 : vector<8x384xf32>, i32 -> vector<8x384xf32>
    %69 = tpu.concatenate %67, %66, %68 in 0 : vector<8x384xf32>, vector<8x384xf32>, vector<8x384xf32> -> vector<24x384xf32>
    %70 = arith.truncf %69 : vector<24x384xf32> to vector<24x384xbf16>
    %cst_25 = arith.constant dense<0.000000e+00> : vector<24x384xf32>
    %71 = tpu.matmul %14, %70, %cst_25 {dimension_numbers = #tpu.dot_dimension_numbers<[1], [0], [0], [1], [0, 0, 1, 1], [], []>} : vector<24x24xbf16>, vector<24x384xbf16>, vector<24x384xf32> -> vector<24x384xf32>
    %72 = vector.extract_strided_slice %71 {offsets = [0, 0], sizes = [8, 384], strides = [1, 1]} : vector<24x384xf32> to vector<8x384xf32>
    %c1_i32_26 = arith.constant 1 : i32
    %73 = tpu.dynamic_rotate %72 by %c1_i32_26 dim 1 : vector<8x384xf32>, i32 -> vector<8x384xf32>
    %74 = vector.extract_strided_slice %71 {offsets = [8, 0], sizes = [8, 384], strides = [1, 1]} : vector<24x384xf32> to vector<8x384xf32>
    %75 = arith.addf %73, %74 : vector<8x384xf32>
    %76 = vector.extract_strided_slice %71 {offsets = [16, 0], sizes = [8, 384], strides = [1, 1]} : vector<24x384xf32> to vector<8x384xf32>
    %c383_i32_27 = arith.constant 383 : i32
    %77 = tpu.dynamic_rotate %76 by %c383_i32_27 dim 1 : vector<8x384xf32>, i32 -> vector<8x384xf32>
    %78 = arith.addf %75, %77 : vector<8x384xf32>
    %79 = vector.broadcast %0 : vector<1x384xf32> to vector<8x384xf32>
    %80 = arith.mulf %78, %79 : vector<8x384xf32>
    %cst_28 = arith.constant dense<0.000000e+00> : vector<8xf32>
    %81 = vector.multi_reduction <add>, %80, %cst_28 [1] : vector<8x384xf32> to vector<8xf32>
    %82 = vector.shape_cast %81 : vector<8xf32> to vector<8x1xf32>
    %cst_29 = arith.constant dense<0.000000e+00> : vector<8x1xf32>
    %83 = tpu.matmul %2, %82, %cst_29 {dimension_numbers = #tpu.dot_dimension_numbers<[1], [0], [0], [1], [0, 0, 1, 1], [], []>} : vector<8x8xf32>, vector<8x1xf32>, vector<8x1xf32> -> vector<8x1xf32>
    %84 = vector.broadcast %10 : vector<1x1xf32> to vector<8x1xf32>
    %85 = arith.mulf %83, %84 : vector<8x1xf32>
    %86 = vector.broadcast %85 : vector<8x1xf32> to vector<8x384xf32>
    %87 = arith.subf %80, %86 : vector<8x384xf32>
    %88 = vector.broadcast %0 : vector<1x384xf32> to vector<8x384xf32>
    %89 = arith.mulf %87, %88 : vector<8x384xf32>
    %90 = arith.mulf %89, %89 : vector<8x384xf32>
    %cst_30 = arith.constant dense<0.000000e+00> : vector<8xf32>
    %91 = vector.multi_reduction <add>, %90, %cst_30 [1] : vector<8x384xf32> to vector<8xf32>
    %92 = vector.shape_cast %91 : vector<8xf32> to vector<8x1xf32>
    %cst_31 = arith.constant dense<0.000000e+00> : vector<8x1xf32>
    %93 = tpu.matmul %2, %92, %cst_31 {dimension_numbers = #tpu.dot_dimension_numbers<[1], [0], [0], [1], [0, 0, 1, 1], [], []>} : vector<8x8xf32>, vector<8x1xf32>, vector<8x1xf32> -> vector<8x1xf32>
    %94 = vector.broadcast %10 : vector<1x1xf32> to vector<8x1xf32>
    %95 = arith.mulf %93, %94 : vector<8x1xf32>
    %cst_32 = arith.constant 9.99999974E-6 : f32
    %96 = vector.broadcast %cst_32 : f32 to vector<8x1xf32>
    %97 = arith.addf %95, %96 : vector<8x1xf32>
    %98 = math.rsqrt %97 : vector<8x1xf32>
    %99 = arith.mulf %98, %3 : vector<8x1xf32>
    %100 = arith.mulf %85, %99 : vector<8x1xf32>
    %101 = arith.subf %4, %100 : vector<8x1xf32>
    %102 = vector.broadcast %99 : vector<8x1xf32> to vector<8x384xf32>
    %103 = arith.mulf %80, %102 : vector<8x384xf32>
    %104 = arith.addf %16, %103 : vector<8x384xf32>
    %105 = vector.broadcast %101 : vector<8x1xf32> to vector<8x384xf32>
    %106 = arith.addf %104, %105 : vector<8x384xf32>
    %c0_33 = arith.constant 0 : index
    %c0_34 = arith.constant 0 : index
    %c0_35 = arith.constant 0 : index
    %107 = vector.load %arg6[%c0_33, %c0_34, %c0_35] : memref<2x8x384xf32, #tpu.memory_space<vmem>>, vector<1x8x384xf32>
    %108 = vector.shape_cast %107 : vector<1x8x384xf32> to vector<8x384xf32>
    %109 = vector.shape_cast %106 : vector<8x384xf32> to vector<1x8x384xf32>
    tpu.vector_store %arg6[%c0_33, %c0_34, %c0_35], %109 {strides = array<i32>} : memref<2x8x384xf32, #tpu.memory_space<vmem>>, vector<1x8x384xf32>,
    %c1_36 = arith.constant 1 : index
    %c0_37 = arith.constant 0 : index
    %c0_38 = arith.constant 0 : index
    %110 = vector.load %arg1[%c1_36, %c0_37, %c0_38] : memref<2x8x384xf32, #tpu.memory_space<vmem>>, vector<1x8x384xf32>
    %111 = vector.shape_cast %110 : vector<1x8x384xf32> to vector<8x384xf32>
    %c1_39 = arith.constant 1 : index
    %c0_40 = arith.constant 0 : index
    %c0_41 = arith.constant 0 : index
    %112 = vector.load %arg2[%c1_39, %c0_40, %c0_41] : memref<2x8x128xf32, #tpu.memory_space<vmem>>, vector<1x8x128xf32>
    %113 = vector.shape_cast %112 : vector<1x8x128xf32> to vector<8x128xf32>
    %114 = vector.extract_strided_slice %113 {offsets = [0, 0], sizes = [8, 1], strides = [1, 1]} : vector<8x128xf32> to vector<8x1xf32>
    %115 = vector.extract_strided_slice %113 {offsets = [0, 1], sizes = [8, 1], strides = [1, 1]} : vector<8x128xf32> to vector<8x1xf32>
    %116 = vector.extract_strided_slice %113 {offsets = [0, 2], sizes = [8, 1], strides = [1, 1]} : vector<8x128xf32> to vector<8x1xf32>
    %c18_i32_42 = arith.constant 18 : i32
    %117 = tpu.dynamic_rotate %111 by %c18_i32_42 dim 1 : vector<8x384xf32>, i32 -> vector<8x384xf32>
    %c366_i32_43 = arith.constant 366 : i32
    %118 = tpu.dynamic_rotate %111 by %c366_i32_43 dim 1 : vector<8x384xf32>, i32 -> vector<8x384xf32>
    %119 = tpu.concatenate %117, %111, %118 in 0 : vector<8x384xf32>, vector<8x384xf32>, vector<8x384xf32> -> vector<24x384xf32>
    %120 = arith.truncf %119 : vector<24x384xf32> to vector<24x384xbf16>
    %cst_44 = arith.constant dense<0.000000e+00> : vector<24x384xf32>
    %121 = tpu.matmul %12, %120, %cst_44 {dimension_numbers = #tpu.dot_dimension_numbers<[1], [0], [0], [1], [0, 0, 1, 1], [], []>} : vector<24x24xbf16>, vector<24x384xbf16>, vector<24x384xf32> -> vector<24x384xf32>
    %122 = vector.extract_strided_slice %121 {offsets = [0, 0], sizes = [8, 384], strides = [1, 1]} : vector<24x384xf32> to vector<8x384xf32>
    %c1_i32_45 = arith.constant 1 : i32
    %123 = tpu.dynamic_rotate %122 by %c1_i32_45 dim 1 : vector<8x384xf32>, i32 -> vector<8x384xf32>
    %124 = vector.extract_strided_slice %121 {offsets = [8, 0], sizes = [8, 384], strides = [1, 1]} : vector<24x384xf32> to vector<8x384xf32>
    %125 = arith.addf %123, %124 : vector<8x384xf32>
    %126 = vector.extract_strided_slice %121 {offsets = [16, 0], sizes = [8, 384], strides = [1, 1]} : vector<24x384xf32> to vector<8x384xf32>
    %c383_i32_46 = arith.constant 383 : i32
    %127 = tpu.dynamic_rotate %126 by %c383_i32_46 dim 1 : vector<8x384xf32>, i32 -> vector<8x384xf32>
    %128 = arith.addf %125, %127 : vector<8x384xf32>
    %129 = vector.broadcast %114 : vector<8x1xf32> to vector<8x384xf32>
    %130 = arith.addf %128, %129 : vector<8x384xf32>
    %131 = vector.broadcast %0 : vector<1x384xf32> to vector<8x384xf32>
    %132 = arith.mulf %130, %131 : vector<8x384xf32>
    %cst_47 = arith.constant dense<0.000000e+00> : vector<8xf32>
    %133 = vector.multi_reduction <add>, %132, %cst_47 [1] : vector<8x384xf32> to vector<8xf32>
    %134 = vector.shape_cast %133 : vector<8xf32> to vector<8x1xf32>
    %cst_48 = arith.constant dense<0.000000e+00> : vector<8x1xf32>
    %135 = tpu.matmul %2, %134, %cst_48 {dimension_numbers = #tpu.dot_dimension_numbers<[1], [0], [0], [1], [0, 0, 1, 1], [], []>} : vector<8x8xf32>, vector<8x1xf32>, vector<8x1xf32> -> vector<8x1xf32>
    %136 = vector.broadcast %10 : vector<1x1xf32> to vector<8x1xf32>
    %137 = arith.mulf %135, %136 : vector<8x1xf32>
    %138 = vector.broadcast %137 : vector<8x1xf32> to vector<8x384xf32>
    %139 = arith.subf %132, %138 : vector<8x384xf32>
    %140 = vector.broadcast %0 : vector<1x384xf32> to vector<8x384xf32>
    %141 = arith.mulf %139, %140 : vector<8x384xf32>
    %142 = arith.mulf %141, %141 : vector<8x384xf32>
    %cst_49 = arith.constant dense<0.000000e+00> : vector<8xf32>
    %143 = vector.multi_reduction <add>, %142, %cst_49 [1] : vector<8x384xf32> to vector<8xf32>
    %144 = vector.shape_cast %143 : vector<8xf32> to vector<8x1xf32>
    %cst_50 = arith.constant dense<0.000000e+00> : vector<8x1xf32>
    %145 = tpu.matmul %2, %144, %cst_50 {dimension_numbers = #tpu.dot_dimension_numbers<[1], [0], [0], [1], [0, 0, 1, 1], [], []>} : vector<8x8xf32>, vector<8x1xf32>, vector<8x1xf32> -> vector<8x1xf32>
    %146 = vector.broadcast %10 : vector<1x1xf32> to vector<8x1xf32>
    %147 = arith.mulf %145, %146 : vector<8x1xf32>
    %cst_51 = arith.constant 9.99999974E-6 : f32
    %148 = vector.broadcast %cst_51 : f32 to vector<8x1xf32>
    %149 = arith.addf %147, %148 : vector<8x1xf32>
    %150 = math.rsqrt %149 : vector<8x1xf32>
    %151 = arith.mulf %150, %115 : vector<8x1xf32>
    %152 = arith.mulf %137, %151 : vector<8x1xf32>
    %153 = arith.subf %116, %152 : vector<8x1xf32>
    %154 = vector.broadcast %151 : vector<8x1xf32> to vector<8x384xf32>
    %155 = arith.mulf %132, %154 : vector<8x384xf32>
    %156 = vector.broadcast %153 : vector<8x1xf32> to vector<8x384xf32>
    %157 = arith.addf %155, %156 : vector<8x384xf32>
    %cst_52 = arith.constant 0.000000e+00 : f32
    %158 = vector.broadcast %cst_52 : f32 to vector<8x384xf32>
    %159 = arith.maximumf %157, %158 : vector<8x384xf32>
    %160 = vector.broadcast %0 : vector<1x384xf32> to vector<8x384xf32>
    %161 = arith.mulf %159, %160 : vector<8x384xf32>
    %c18_i32_53 = arith.constant 18 : i32
    %162 = tpu.dynamic_rotate %161 by %c18_i32_53 dim 1 : vector<8x384xf32>, i32 -> vector<8x384xf32>
    %c366_i32_54 = arith.constant 366 : i32
    %163 = tpu.dynamic_rotate %161 by %c366_i32_54 dim 1 : vector<8x384xf32>, i32 -> vector<8x384xf32>
    %164 = tpu.concatenate %162, %161, %163 in 0 : vector<8x384xf32>, vector<8x384xf32>, vector<8x384xf32> -> vector<24x384xf32>
    %165 = arith.truncf %164 : vector<24x384xf32> to vector<24x384xbf16>
    %cst_55 = arith.constant dense<0.000000e+00> : vector<24x384xf32>
    %166 = tpu.matmul %14, %165, %cst_55 {dimension_numbers = #tpu.dot_dimension_numbers<[1], [0], [0], [1], [0, 0, 1, 1], [], []>} : vector<24x24xbf16>, vector<24x384xbf16>, vector<24x384xf32> -> vector<24x384xf32>
    %167 = vector.extract_strided_slice %166 {offsets = [0, 0], sizes = [8, 384], strides = [1, 1]} : vector<24x384xf32> to vector<8x384xf32>
    %c1_i32_56 = arith.constant 1 : i32
    %168 = tpu.dynamic_rotate %167 by %c1_i32_56 dim 1 : vector<8x384xf32>, i32 -> vector<8x384xf32>
    %169 = vector.extract_strided_slice %166 {offsets = [8, 0], sizes = [8, 384], strides = [1, 1]} : vector<24x384xf32> to vector<8x384xf32>
    %170 = arith.addf %168, %169 : vector<8x384xf32>
    %171 = vector.extract_strided_slice %166 {offsets = [16, 0], sizes = [8, 384], strides = [1, 1]} : vector<24x384xf32> to vector<8x384xf32>
    %c383_i32_57 = arith.constant 383 : i32
    %172 = tpu.dynamic_rotate %171 by %c383_i32_57 dim 1 : vector<8x384xf32>, i32 -> vector<8x384xf32>
    %173 = arith.addf %170, %172 : vector<8x384xf32>
    %174 = vector.broadcast %0 : vector<1x384xf32> to vector<8x384xf32>
    %175 = arith.mulf %173, %174 : vector<8x384xf32>
    %cst_58 = arith.constant dense<0.000000e+00> : vector<8xf32>
    %176 = vector.multi_reduction <add>, %175, %cst_58 [1] : vector<8x384xf32> to vector<8xf32>
    %177 = vector.shape_cast %176 : vector<8xf32> to vector<8x1xf32>
    %cst_59 = arith.constant dense<0.000000e+00> : vector<8x1xf32>
    %178 = tpu.matmul %2, %177, %cst_59 {dimension_numbers = #tpu.dot_dimension_numbers<[1], [0], [0], [1], [0, 0, 1, 1], [], []>} : vector<8x8xf32>, vector<8x1xf32>, vector<8x1xf32> -> vector<8x1xf32>
    %179 = vector.broadcast %10 : vector<1x1xf32> to vector<8x1xf32>
    %180 = arith.mulf %178, %179 : vector<8x1xf32>
    %181 = vector.broadcast %180 : vector<8x1xf32> to vector<8x384xf32>
    %182 = arith.subf %175, %181 : vector<8x384xf32>
    %183 = vector.broadcast %0 : vector<1x384xf32> to vector<8x384xf32>
    %184 = arith.mulf %182, %183 : vector<8x384xf32>
    %185 = arith.mulf %184, %184 : vector<8x384xf32>
    %cst_60 = arith.constant dense<0.000000e+00> : vector<8xf32>
    %186 = vector.multi_reduction <add>, %185, %cst_60 [1] : vector<8x384xf32> to vector<8xf32>
    %187 = vector.shape_cast %186 : vector<8xf32> to vector<8x1xf32>
    %cst_61 = arith.constant dense<0.000000e+00> : vector<8x1xf32>
    %188 = tpu.matmul %2, %187, %cst_61 {dimension_numbers = #tpu.dot_dimension_numbers<[1], [0], [0], [1], [0, 0, 1, 1], [], []>} : vector<8x8xf32>, vector<8x1xf32>, vector<8x1xf32> -> vector<8x1xf32>
    %189 = vector.broadcast %10 : vector<1x1xf32> to vector<8x1xf32>
    %190 = arith.mulf %188, %189 : vector<8x1xf32>
    %cst_62 = arith.constant 9.99999974E-6 : f32
    %191 = vector.broadcast %cst_62 : f32 to vector<8x1xf32>
    %192 = arith.addf %190, %191 : vector<8x1xf32>
    %193 = math.rsqrt %192 : vector<8x1xf32>
    %194 = arith.mulf %193, %3 : vector<8x1xf32>
    %195 = arith.mulf %180, %194 : vector<8x1xf32>
    %196 = arith.subf %4, %195 : vector<8x1xf32>
    %197 = vector.broadcast %194 : vector<8x1xf32> to vector<8x384xf32>
    %198 = arith.mulf %175, %197 : vector<8x384xf32>
    %199 = arith.addf %111, %198 : vector<8x384xf32>
    %200 = vector.broadcast %196 : vector<8x1xf32> to vector<8x384xf32>
    %201 = arith.addf %199, %200 : vector<8x384xf32>
    %c1_63 = arith.constant 1 : index
    %c0_64 = arith.constant 0 : index
    %c0_65 = arith.constant 0 : index
    %202 = vector.load %arg6[%c1_63, %c0_64, %c0_65] : memref<2x8x384xf32, #tpu.memory_space<vmem>>, vector<1x8x384xf32>
    %203 = vector.shape_cast %202 : vector<1x8x384xf32> to vector<8x384xf32>
    %204 = vector.shape_cast %201 : vector<8x384xf32> to vector<1x8x384xf32>
    tpu.vector_store %arg6[%c1_63, %c0_64, %c0_65], %204 {strides = array<i32>} : memref<2x8x384xf32, #tpu.memory_space<vmem>>, vector<1x8x384xf32>,
    return
  }
  func.func @transform_0(%arg0: i32) -> (i32, i32, i32) {
    %c0_i32 = arith.constant 0 : i32
    %c0_i32_0 = arith.constant 0 : i32
    %c0_i32_1 = arith.constant 0 : i32
    return %arg0, %c0_i32, %c0_i32_0 : i32, i32, i32
  }
  func.func @transform_1(%arg0: i32) -> (i32, i32, i32) {
    %c0_i32 = arith.constant 0 : i32
    %c0_i32_0 = arith.constant 0 : i32
    %c0_i32_1 = arith.constant 0 : i32
    return %arg0, %c0_i32, %c0_i32_0 : i32, i32, i32
  }
  func.func @transform_2(%arg0: i32) -> (i32, i32, i32) {
    %c0_i32 = arith.constant 0 : i32
    %c0_i32_0 = arith.constant 0 : i32
    %c0_i32_1 = arith.constant 0 : i32
    %c0_i32_2 = arith.constant 0 : i32
    return %c0_i32, %c0_i32_0, %c0_i32_1 : i32, i32, i32
  }
  func.func @transform_3(%arg0: i32) -> (i32, i32) {
    %c0_i32 = arith.constant 0 : i32
    %c0_i32_0 = arith.constant 0 : i32
    %c0_i32_1 = arith.constant 0 : i32
    return %c0_i32, %c0_i32_0 : i32, i32
  }
  func.func @transform_4(%arg0: i32) -> (i32, i32) {
    %c0_i32 = arith.constant 0 : i32
    %c0_i32_0 = arith.constant 0 : i32
    %c0_i32_1 = arith.constant 0 : i32
    return %c0_i32, %c0_i32_0 : i32, i32
  }
  func.func @transform_5(%arg0: i32) -> (i32, i32, i32) {
    %c0_i32 = arith.constant 0 : i32
    %c0_i32_0 = arith.constant 0 : i32
    %c0_i32_1 = arith.constant 0 : i32
    return %arg0, %c0_i32, %c0_i32_0 : i32, i32, i32
  }
}

</mosaic_0001>

<llo_original>
// kernel: tpu_custom_call.1
$region0: #{tpu_custom_call.1}
  #allocation0 [shape = 'u32[]', space=smem, size = 0x4, offset = 0x4, fixed_abs, tag = 'smem constant byte address 0x4 - core index']
  #allocation1 [shape = 'u32[144,128]{1,0:T(1,128)}', space=vmem, size = 0x12000, scoped, tag = 'internal scratch']
  %s0 = inlined_call_operand.hbm [shape: f32[4,8,384], index: 0, kind: input, shape index: {}]
  %s1 = inlined_call_operand.hbm [shape: f32[4,8,128], index: 1, kind: input, shape index: {}]
  %s2 = inlined_call_operand.hbm [shape: bf16[2,24,24], index: 2, kind: input, shape index: {}]
  %s3 = inlined_call_operand.hbm [shape: f32[8,128], index: 3, kind: input, shape index: {}]
  %s4 = inlined_call_operand.vmem [shape: f32[1,384], index: 4, kind: input, shape index: {}]
  %s5 = inlined_call_operand.hbm [shape: f32[4,8,384], index: 5, kind: output, shape index: {}]
  %s6 = sld [smem:[#allocation0]]
  $region69: #{tpu_custom_call.1} parent=0
    _
  %s8 = ssub.s32 1, %s6
  %s9 = scalar_select 0, %s8, %s6
  $region1: #{tpu_custom_call.1} parent=0
    #allocation2 [shape = 'u8[49152]{0}', space=vmem, size = 0xc000, scoped, tag = 'input window, operand 0']
    #allocation3 [shape = 's32[2]{0}', space=sflag, size = 0x8, scoped, tag = 'scoped memory for tpu_custom_call.1']
    #allocation4 [shape = 's32[2]{0}', space=sflag, size = 0x8, scoped, tag = 'scoped memory for tpu_custom_call.1']
    #allocation5 [shape = 'u8[16384]{0}', space=vmem, size = 0x4000, scoped, tag = 'input window, operand 1']
    #allocation6 [shape = 's32[2]{0}', space=sflag, size = 0x8, scoped, tag = 'scoped memory for tpu_custom_call.1']
    #allocation7 [shape = 'u8[12288]{0}', space=vmem, size = 0x3000, scoped, tag = 'input window, operand 2, single buffered']
    #allocation8 [shape = 'u8[4096]{0}', space=vmem, size = 0x1000, scoped, tag = 'input window, operand 3, single buffered']
    #allocation9 [shape = 's32[1]{0}', space=sflag, size = 0x4, scoped, tag = 'scoped memory for tpu_custom_call.1']
    #allocation10 [shape = 'u8[49152]{0}', space=vmem, size = 0xc000, scoped, tag = 'output window, operand 0']
    %10 = vsyncpa [#allocation3], 0
    %s11 = scalar_lea.sflag [#allocation3], 1
    %12 = vsyncpa %s11, 0
    %13 = vsyncpa [#allocation6], 0
    %s14 = scalar_lea.sflag [#allocation6], 1
    %15 = vsyncpa %s14, 0
    %16 = vsyncpa [#allocation9], 0
    %17 = vsyncpa [#allocation4], 0
    %s18 = scalar_lea.sflag [#allocation4], 1
    %19 = vsyncpa %s18, 0
    loop: start=0, step=1, limit=4
    $region2: #{tpu_custom_call.1} parent=1 // loop_pre_header
      _
    $region3: #{tpu_custom_call.1} parent=1 // loop_header
      %s21 = sphi 0, %s25
      %p22 = scmp.ge.s32.totalorder %s21, 4
      %s31 = sphi 0, %s33
      %s34 = sphi 0, %s31
      %s35 = sphi 0, %s34
      %s51 = sphi 0, %s35
      %s57 = sphi 0, %s59
      %s60 = sphi 0, %s57
      %s61 = sphi 0, %s60
      %s77 = sphi 0, %s61
      %s81 = sphi 0, %s81
      %s83 = sphi 0, %s81
      %s84 = sphi 0, %s83
      %s98 = sphi 0, %s84
      %s102 = sphi 0, %s102
      %s104 = sphi 0, %s102
      %s105 = sphi 0, %s104
      %s119 = sphi 0, %s105
      %s123 = sphi 0, %s123
      %s125 = sphi 0, %s123
      %s126 = sphi 0, %s125
      %s140 = sphi 0, %s126
      %s146 = sphi 0, %s148
      %s149 = sphi 0, %s146
      %s150 = sphi 0, %s149
      %s166 = sphi 0, %s150
    $region4: #{tpu_custom_call.1} parent=1 // loop_header_branch
      %24 = sbr.rel (%p22) target = $region8
    $region5: #{tpu_custom_call.1} parent=1 // loop_body
      %s26 = ssub.s32 %s21, 1
      %s27 = ssub.s32 %s21, 2
      %s28 = sadd.s32 %s21, 1
      %s29 = ssub.s32 %s21, %s28
      %p30 = scmp.eq.s32.totalorder %s29, 0
      %s32 = sadd.s32 %s31, 1
      %s33 = scalar_select %p30, %s31, %s32
      %p36 = pneg %p30
      %p37 = scmp.eq.s32.totalorder %s21, 1
      %p38 = por %p36, %p37
      %p39 = scmp.ne.s32.totalorder %s31, %s34
      %p40 = scmp.eq.s32.totalorder %s21, 0
      %p41 = por %p39, %p40
      %p42 = scmp.ne.s32.totalorder %s31, %s34
      %p43 = scmp.eq.s32.totalorder %s26, 1
      %p44 = por %p42, %p43
      %p45 = scmp.ne.s32.totalorder %s34, %s35
      %p46 = scmp.eq.s32.totalorder %s26, 0
      %p47 = por %p45, %p46
      %p48 = scmp.ne.s32.totalorder %s34, %s35
      %p49 = scmp.eq.s32.totalorder %s27, 1
      %p50 = por %p48, %p49
      %p52 = scmp.ne.s32.totalorder %s35, %s51
      %p53 = scmp.eq.s32.totalorder %s27, 0
      %p54 = por %p52, %p53
      %s55 = ssub.s32 %s21, %s28
      %p56 = scmp.eq.s32.totalorder %s55, 0
      %s58 = sadd.s32 %s57, 1
      %s59 = scalar_select %p56, %s57, %s58
      %p62 = pneg %p56
      %p63 = scmp.eq.s32.totalorder %s21, 1
      %p64 = por %p62, %p63
      %p65 = scmp.ne.s32.totalorder %s57, %s60
      %p66 = scmp.eq.s32.totalorder %s21, 0
      %p67 = por %p65, %p66
      %p68 = scmp.ne.s32.totalorder %s57, %s60
      %p69 = scmp.eq.s32.totalorder %s26, 1
      %p70 = por %p68, %p69
      %p71 = scmp.ne.s32.totalorder %s60, %s61
      %p72 = scmp.eq.s32.totalorder %s26, 0
      %p73 = por %p71, %p72
      %p74 = scmp.ne.s32.totalorder %s60, %s61
      %p75 = scmp.eq.s32.totalorder %s27, 1
      %p76 = por %p74, %p75
      %p78 = scmp.ne.s32.totalorder %s61, %s77
      %p79 = scmp.eq.s32.totalorder %s27, 0
      %p80 = por %p78, %p79
      %s82 = sadd.s32 %s81, 1
      %p85 = scmp.eq.s32.totalorder %s21, 1
      %p86 = scmp.ne.s32.totalorder %s81, %s83
      %p87 = scmp.eq.s32.totalorder %s21, 0
      %p88 = por %p86, %p87
      %p89 = scmp.ne.s32.totalorder %s81, %s83
      %p90 = scmp.eq.s32.totalorder %s26, 1
      %p91 = por %p89, %p90
      %p92 = scmp.ne.s32.totalorder %s83, %s84
      %p93 = scmp.eq.s32.totalorder %s26, 0
      %p94 = por %p92, %p93
      %p95 = scmp.ne.s32.totalorder %s83, %s84
      %p96 = scmp.eq.s32.totalorder %s27, 1
      %p97 = por %p95, %p96
      %p99 = scmp.ne.s32.totalorder %s84, %s98
      %p100 = scmp.eq.s32.totalorder %s27, 0
      %p101 = por %p99, %p100
      %s103 = sadd.s32 %s102, 1
      %p106 = scmp.eq.s32.totalorder %s21, 1
      %p107 = scmp.ne.s32.totalorder %s102, %s104
      %p108 = scmp.eq.s32.totalorder %s21, 0
      %p109 = por %p107, %p108
      %p110 = scmp.ne.s32.totalorder %s102, %s104
      %p111 = scmp.eq.s32.totalorder %s26, 1
      %p112 = por %p110, %p111
      %p113 = scmp.ne.s32.totalorder %s104, %s105
      %p114 = scmp.eq.s32.totalorder %s26, 0
      %p115 = por %p113, %p114
      %p116 = scmp.ne.s32.totalorder %s104, %s105
      %p117 = scmp.eq.s32.totalorder %s27, 1
      %p118 = por %p116, %p117
      %p120 = scmp.ne.s32.totalorder %s105, %s119
      %p121 = scmp.eq.s32.totalorder %s27, 0
      %p122 = por %p120, %p121
      %s124 = sadd.s32 %s123, 1
      %p127 = scmp.eq.s32.totalorder %s21, 1
      %p128 = scmp.ne.s32.totalorder %s123, %s125
      %p129 = scmp.eq.s32.totalorder %s21, 0
      %p130 = por %p128, %p129
      %p131 = scmp.ne.s32.totalorder %s123, %s125
      %p132 = scmp.eq.s32.totalorder %s26, 1
      %p133 = por %p131, %p132
      %p134 = scmp.ne.s32.totalorder %s125, %s126
      %p135 = scmp.eq.s32.totalorder %s26, 0
      %p136 = por %p134, %p135
      %p137 = scmp.ne.s32.totalorder %s125, %s126
      %p138 = scmp.eq.s32.totalorder %s27, 1
      %p139 = por %p137, %p138
      %p141 = scmp.ne.s32.totalorder %s126, %s140
      %p142 = scmp.eq.s32.totalorder %s27, 0
      %p143 = por %p141, %p142
      %s144 = ssub.s32 %s21, %s28
      %p145 = scmp.eq.s32.totalorder %s144, 0
      %s147 = sadd.s32 %s146, 1
      %s148 = scalar_select %p145, %s146, %s147
      %p151 = pneg %p145
      %p152 = scmp.eq.s32.totalorder %s21, 1
      %p153 = por %p151, %p152
      %p154 = scmp.ne.s32.totalorder %s146, %s149
      %p155 = scmp.eq.s32.totalorder %s21, 0
      %p156 = por %p154, %p155
      %p157 = scmp.ne.s32.totalorder %s146, %s149
      %p158 = scmp.eq.s32.totalorder %s26, 1
      %p159 = por %p157, %p158
      %p160 = scmp.ne.s32.totalorder %s149, %s150
      %p161 = scmp.eq.s32.totalorder %s26, 0
      %p162 = por %p160, %p161
      %p163 = scmp.ne.s32.totalorder %s149, %s150
      %p164 = scmp.eq.s32.totalorder %s27, 1
      %p165 = por %p163, %p164
      %p167 = scmp.ne.s32.totalorder %s150, %s166
      %p168 = scmp.eq.s32.totalorder %s27, 0
      %p169 = por %p167, %p168
      %p170 = scmp.le.s32.totalorder 1, %s21
      %p171 = scmp.lt.s32.totalorder %s21, 3
      %p172 = pnand %p170, %p171
      %p173 = pneg %p172
      // Predicated region
      $region9: #{tpu_custom_call.1} parent=5 // pred_check
        _
      $region10: #{tpu_custom_call.1} parent=5 // pred_check_branch
        %175 = sbr.rel (%p172) target = $region12
      $region11: #{tpu_custom_call.1} parent=5 // pred_region
        %s176 = ssub.s32 %s21, 1
        // Predicated region
        $region13: #{tpu_custom_call.1} parent=11 // pred_check
          %p177 = pneg %p94
        $region14: #{tpu_custom_call.1} parent=11 // pred_check_branch
          %179 = sbr.rel (%p177) target = $region16
        $region15: #{tpu_custom_call.1} parent=11 // pred_region
          %s181 = ssub.s32 384, 384
          %182 = vsyncadd [#allocation6], %s181
          %s183 = sshll.u32 [#allocation7], 4
          %s184 = int_to_ptr.vmem [resolvable:$true] %s183
          %189 = dma.hbm_to_vmem [thread:$0]  %s2, 384, %s184, [#allocation6], 64, 64, 4
        $region16: #{tpu_custom_call.1} parent=11 // pred_fallthru
          _
        // Predicated region
        $region17: #{tpu_custom_call.1} parent=11 // pred_check
          %p190 = pneg %p115
        $region18: #{tpu_custom_call.1} parent=11 // pred_check_branch
          %192 = sbr.rel (%p190) target = $region20
        $region19: #{tpu_custom_call.1} parent=11 // pred_region
          %s194 = ssub.s32 128, 128
          %195 = vsyncadd [#allocation9], %s194
          %s197 = sshll.u32 [#allocation8], 4
          %s198 = int_to_ptr.vmem [resolvable:$true] %s197
          %200 = dma.hbm_to_vmem [thread:$0]  %s3, 128, %s198, [#allocation9]
        $region20: #{tpu_custom_call.1} parent=11 // pred_fallthru
          _
        // Predicated region
        $region21: #{tpu_custom_call.1} parent=11 // pred_check
          %p201 = pneg %p136
        $region22: #{tpu_custom_call.1} parent=11 // pred_check_branch
          %203 = sbr.rel (%p201) target = $region24
        $region23: #{tpu_custom_call.1} parent=11 // pred_region
          _
        $region24: #{tpu_custom_call.1} parent=11 // pred_fallthru
          _
      $region12: #{tpu_custom_call.1} parent=5 // pred_fallthru
        _
      %p204 = scmp.lt.s32.totalorder %s21, 2
      // Predicated region
      $region25: #{tpu_custom_call.1} parent=5 // pred_check
        %p205 = pneg %p204
      $region26: #{tpu_custom_call.1} parent=5 // pred_check_branch
        %207 = sbr.rel (%p205) target = $region28
      $region27: #{tpu_custom_call.1} parent=5 // pred_region
        // Predicated region
        $region29: #{tpu_custom_call.1} parent=27 // pred_check
          %p208 = pneg %p41
        $region30: #{tpu_custom_call.1} parent=27 // pred_check_branch
          %210 = sbr.rel (%p208) target = $region32
        $region31: #{tpu_custom_call.1} parent=27 // pred_region
          %s211 = sand.u32 %s31, 1
          %s212 = scalar_lea.sflag [#allocation3], %s211
          %s213 = sand.u32 %s31, 1
          %s214 = smul.addr %s213, 48
          %s215 = scalar_lea.vmem [#allocation2], %s214
          %s216 = smul.u32 2, %s21
          %s218 = ssub.s32 768, 768
          %219 = vsyncadd %s212, %s218
          %s220 = smul.addr %s216, 3
          %s221 = smul.addr %s220, 128
          %s222 = scalar_lea.hbm %s0, %s221
          %s223 = sshll.u32 %s215, 4
          %s224 = int_to_ptr.vmem [resolvable:$true] %s223
          %229 = dma.hbm_to_vmem [thread:$0]  %s222, 768, %s224, %s212, 384, 384, 24
        $region32: #{tpu_custom_call.1} parent=27 // pred_fallthru
          _
        // Predicated region
        $region33: #{tpu_custom_call.1} parent=27 // pred_check
          %p230 = pneg %p67
        $region34: #{tpu_custom_call.1} parent=27 // pred_check_branch
          %232 = sbr.rel (%p230) target = $region36
        $region35: #{tpu_custom_call.1} parent=27 // pred_region
          %s233 = sand.u32 %s21, 1
          %s234 = scalar_lea.sflag [#allocation6], %s233
          %s235 = sand.u32 %s57, 1
          %s236 = smul.addr %s235, 16
          %s237 = scalar_lea.vmem [#allocation5], %s236
          %s238 = smul.u32 2, %s21
          %s240 = ssub.s32 256, 256
          %241 = vsyncadd %s234, %s240
          %s242 = smul.addr %s238, 128
          %s243 = scalar_lea.hbm %s1, %s242
          %s244 = sshll.u32 %s237, 4
          %s245 = int_to_ptr.vmem [resolvable:$true] %s244
          %250 = dma.hbm_to_vmem [thread:$0]  %s243, 256, %s245, %s234, 128, 128, 8
        $region36: #{tpu_custom_call.1} parent=27 // pred_fallthru
          _
      $region28: #{tpu_custom_call.1} parent=5 // pred_fallthru
        _
      %p251 = scmp.le.s32.totalorder 1, %s21
      %p252 = scmp.lt.s32.totalorder %s21, 3
      %p253 = pnand %p251, %p252
      %p254 = pneg %p253
      // Predicated region
      $region37: #{tpu_custom_call.1} parent=5 // pred_check
        _
      $region38: #{tpu_custom_call.1} parent=5 // pred_check_branch
        %256 = sbr.rel (%p253) target = $region40
      $region39: #{tpu_custom_call.1} parent=5 // pred_region
        %s257 = ssub.s32 %s21, 1
        %s258 = sand.u32 %s34, 1
        %s259 = scalar_lea.sflag [#allocation3], %s258
        %s260 = sand.u32 %s34, 1
        %s261 = smul.addr %s260, 48
        %s262 = scalar_lea.vmem [#allocation2], %s261
        // Predicated region
        $region41: #{tpu_custom_call.1} parent=39 // pred_check
          %p263 = pneg %p47
        $region42: #{tpu_custom_call.1} parent=39 // pred_check_branch
          %265 = sbr.rel (%p263) target = $region44
        $region43: #{tpu_custom_call.1} parent=39 // pred_region
          %266 = dma.done %s259, 768
        $region44: #{tpu_custom_call.1} parent=39 // pred_fallthru
          _
        %s267 = sand.u32 %s26, 1
        %s268 = scalar_lea.sflag [#allocation6], %s267
        %s269 = sand.u32 %s60, 1
        %s270 = smul.addr %s269, 16
        %s271 = scalar_lea.vmem [#allocation5], %s270
        // Predicated region
        $region45: #{tpu_custom_call.1} parent=39 // pred_check
          %p272 = pneg %p73
        $region46: #{tpu_custom_call.1} parent=39 // pred_check_branch
          %274 = sbr.rel (%p272) target = $region48
        $region47: #{tpu_custom_call.1} parent=39 // pred_region
          %275 = dma.done %s268, 256
        $region48: #{tpu_custom_call.1} parent=39 // pred_fallthru
          _
        // Predicated region
        $region49: #{tpu_custom_call.1} parent=39 // pred_check
          %p276 = pneg %p94
        $region50: #{tpu_custom_call.1} parent=39 // pred_check_branch
          %278 = sbr.rel (%p276) target = $region52
        $region51: #{tpu_custom_call.1} parent=39 // pred_region
          %279 = dma.done [#allocation6], 384
        $region52: #{tpu_custom_call.1} parent=39 // pred_fallthru
          _
        // Predicated region
        $region53: #{tpu_custom_call.1} parent=39 // pred_check
          %p280 = pneg %p115
        $region54: #{tpu_custom_call.1} parent=39 // pred_check_branch
          %282 = sbr.rel (%p280) target = $region56
        $region55: #{tpu_custom_call.1} parent=39 // pred_region
          %283 = dma.done [#allocation9], 128
        $region56: #{tpu_custom_call.1} parent=39 // pred_fallthru
          _
        %s284 = sand.u32 %s34, 1
        %s285 = scalar_lea.sflag [#allocation3], %s284
        %s286 = sand.u32 %s34, 1
        %s287 = smul.addr %s286, 48
        %s288 = scalar_lea.vmem [#allocation2], %s287
        %p289 = pneg %p47
        %p290 = pneg %p44
        %s291 = sand.u32 %s26, 1
        %s292 = scalar_lea.sflag [#allocation6], %s291
        %s293 = sand.u32 %s60, 1
        %s294 = smul.addr %s293, 16
        %s295 = scalar_lea.vmem [#allocation5], %s294
        %p296 = pneg %p73
        %p297 = pneg %p70
        %p298 = pneg %p94
        %p299 = pneg %p91
        %p300 = pneg %p115
        %p301 = pneg %p112
        %p302 = pneg %p136
        %p303 = pneg %p133
        %p304 = pneg %p162
        %p305 = pneg %p159
        %s306 = sand.u32 %s149, 1
        %s307 = scalar_lea.sflag [#allocation4], %s306
        %s308 = sand.u32 %s149, 1
        %s309 = smul.addr %s308, 48
        %s310 = scalar_lea.vmem [#allocation10], %s309
        %s311 = smul.u32 2, %s26
        %s312 = smul.u32 2, %s26
        %s313 = smul.u32 2, %s26
        %v315 = vld [vmem:[%s4] sm:$0x7]
        %v316 = vld [vmem:[#allocation8] sm:$0xff]
        %v318 = vlaneseq
        %v319 = vshrl.u32 %v318, 7
        %v320 = vsub.s32 0, %v319
        %v321 = vrot.slane %v315, %v320
        %v322 = vlaneseq
        %v323 = vshrl.u32 %v322, 7
        %v324 = vsub.s32 1, %v323
        %v325 = vrot.slane %v315, %v324
        %v326 = vlaneseq
        %v327 = vshrl.u32 %v326, 7
        %v328 = vsub.s32 2, %v327
        %v329 = vrot.slane %v315, %v328
        %vm333 = vcmask 1040384
        %v334 = vsel %vm333, %v321, 0.0
        %v335 = vsel %vm333, %v325, 0.0
        %v336 = vadd.f32 %v334, %v335
        %v337 = vsel %vm333, %v329, 0.0
        %v338 = vadd.f32 %v336, %v337
        %339 = vadd.xlane.f32.xlu0 %v338
        %v340 = vpop.xlane.xlu0 %339
        %v341 = vmul.f32 %v340, 4.0
        %v342 = vrcp.pop %v341
        %v343 = vmul.f32 1.0, %v342
        %v344 = vld [vmem:[#allocation7] sm:$0xf]
        %v345 = vld [vmem:[#allocation7 + $0x4] sm:$0xf]
        %v346 = vld [vmem:[#allocation7 + $0x8] sm:$0xf]
        %s347 = scalar_lea.vmem [#allocation7], 12
        %v348 = vld [vmem:[%s347] sm:$0xf]
        %v349 = vld [vmem:[%s347 + $0x4] sm:$0xf]
        %v350 = vld [vmem:[%s347 + $0x8] sm:$0xf]
        %v351 = vld [vmem:[%s262] sm:$0xff]
        %v352 = vld [vmem:[%s262 + $0x8] sm:$0xff]
        %v353 = vld [vmem:[%s262 + $0x10] sm:$0xff]
        %v354 = vld [vmem:[%s271] sm:$0xff]
        %355 = vrot.lane.b32.xlu0 %v351, 18
        %v356 = vpop.permute.xlu0 %355
        %357 = vrot.lane.b32.xlu0 %v352, 18
        %v358 = vpop.permute.xlu0 %357
        %359 = vrot.lane.b32.xlu0 %v353, 18
        %v360 = vpop.permute.xlu0 %359
        %v361 = vlaneseq
        %v362 = vand.u32 %v361, 127
        %vm363 = vcmp.lt.s32.totalorder %v362, 18
        %v364 = vsel %vm363, %v358, %v360
        %v365 = vsel %vm363, %v356, %v358
        %v366 = vsel %vm363, %v360, %v356
        %367 = vrot.lane.b32.xlu0 %v351, 110
        %v368 = vpop.permute.xlu0 %367
        %369 = vrot.lane.b32.xlu0 %v352, 110
        %v370 = vpop.permute.xlu0 %369
        %371 = vrot.lane.b32.xlu0 %v353, 110
        %v372 = vpop.permute.xlu0 %371
        %vm373 = vcmp.lt.s32.totalorder %v362, 110
        %v374 = vsel %vm373, %v370, %v372
        %v375 = vsel %vm373, %v368, %v370
        %v376 = vsel %vm373, %v372, %v368
        %v377 = vpack.c.bf16 %v351, %v366
        %v378 = vpack.c.bf16 %v352, %v365
        %v379 = vpack.c.bf16 %v353, %v364
        %v380 = vpack.c.bf16 %v375, %v375
        %v381 = vpack.c.bf16 %v374, %v374
        %v382 = vpack.c.bf16 %v376, %v376
        %v386 = vunpack.c.l.b16 %v344
        %v387 = vunpack.c.l.b16 %v345
        %v388 = vunpack.c.l.b16 %v346
        %v389 = vpack.c.b16 %v387, %v386
        %v390 = vpack.c.b16 %v388, %v388
        %vm391 = vcmask 195584
        %v393 = vsel %vm391, %v389, 0
        %v396 = vsel %vm391, %v390, 0
        %vm398 = vcmask 1043456
        %v400 = vsel %vm398, %v380, 0
        %v403 = vsel %vm398, %v381, 0
        %v406 = vsel %vm398, %v382, 0
        %408 = vmatprep.subr.bf16.mxu0 0
        %409 = vmatpush1.bf16.msra.mxu0 0
        %410 = vmatprep.subr.bf16.mxu0 0
        %411 = vmatpush1.bf16.msra.mxu0 0
        %412 = vmatprep.subr.bf16.mxu0 0
        %413 = vmatpush1.bf16.msra.mxu0 0
        %414 = vmatprep.subr.bf16.mxu0 0
        %415 = vmatpush1.bf16.msra.mxu0 0
        %416 = vmatprep.subr.bf16.mxu0 0
        %417 = vmatpush1.bf16.msra.mxu0 0
        %418 = vmatprep.subr.bf16.mxu0 0
        %419 = vmatpush1.bf16.msra.mxu0 0
        %420 = vmatprep.subr.bf16.mxu0 %v403
        %421 = vmatpush1.bf16.msra.mxu0 %v400
        %422 = vmatprep.subr.bf16.mxu0 %v378
        %423 = vmatpush1.bf16.msra.mxu0 %v377
        %424 = vmatprep.subr.bf16.mxu0 0
        %425 = vmatpush2.bf16.msra.mxu0 0
        %426 = vmatprep.subr.bf16.mxu0 0
        %427 = vmatpush2.bf16.msra.mxu0 0
        %428 = vmatprep.subr.bf16.mxu0 0
        %429 = vmatpush2.bf16.msra.mxu0 0
        %430 = vmatprep.subr.bf16.mxu0 0
        %431 = vmatpush2.bf16.msra.mxu0 0
        %432 = vmatprep.subr.bf16.mxu0 0
        %433 = vmatpush2.bf16.msra.mxu0 0
        %434 = vmatprep.subr.bf16.mxu0 0
        %435 = vmatpush2.bf16.msra.mxu0 0
        %436 = vmatprep.subr.bf16.mxu0 0
        %437 = vmatpush2.bf16.msra.mxu0 0
        %438 = vmatprep.subr.bf16.mxu0 0
        %439 = vmatpush2.bf16.msra.mxu0 0
        %440 = vmatprep.mubr.bf16.mxu0 0
        %441 = vmatmul.mubr.bf16.gmra.mxu0 %v393
        %v442 = vpop.f32.mrf.mxu0
        %v443 = vadd.f32 0.0, %v442
        %v444 = vpop.f32.mrf.mxu0
        %v445 = vadd.f32 0.0, %v444
        %v446 = vpop.f32.mrf.mxu0
        %v447 = vadd.f32 0.0, %v446
        %v448 = vpop.f32.mrf.mxu0
        %v449 = vadd.f32 0.0, %v448
        %450 = vmatprep.mubr.bf16.mxu0 0
        %451 = vmatmul.mubr.bf16.gmra.mxu0 %v396
        %v452 = vpop.f32.mrf.mxu0
        %v453 = vadd.f32 0.0, %v452
        %v454 = vpop.f32.mrf.mxu0
        %v455 = vadd.f32 0.0, %v454
        %v456 = vpop.f32.mrf.mxu0
        %v457 = vpop.f32.mrf.mxu0
        %458 = vdwg.mxu0
        %459 = vmatprep.subr.bf16.mxu0 0
        %460 = vmatpush1.bf16.msra.mxu0 0
        %461 = vmatprep.subr.bf16.mxu0 0
        %462 = vmatpush1.bf16.msra.mxu0 0
        %463 = vmatprep.subr.bf16.mxu0 0
        %464 = vmatpush1.bf16.msra.mxu0 0
        %465 = vmatprep.subr.bf16.mxu0 0
        %466 = vmatpush1.bf16.msra.mxu0 0
        %467 = vmatprep.subr.bf16.mxu0 0
        %468 = vmatpush1.bf16.msra.mxu0 0
        %469 = vmatprep.subr.bf16.mxu0 0
        %470 = vmatpush1.bf16.msra.mxu0 0
        %471 = vmatprep.subr.bf16.mxu0 0
        %472 = vmatpush1.bf16.msra.mxu0 %v406
        %473 = vmatprep.subr.bf16.mxu0 0
        %474 = vmatpush1.bf16.msra.mxu0 %v379
        %475 = vmatprep.subr.bf16.mxu0 0
        %476 = vmatpush2.bf16.msra.mxu0 0
        %477 = vmatprep.subr.bf16.mxu0 0
        %478 = vmatpush2.bf16.msra.mxu0 0
        %479 = vmatprep.subr.bf16.mxu0 0
        %480 = vmatpush2.bf16.msra.mxu0 0
        %481 = vmatprep.subr.bf16.mxu0 0
        %482 = vmatpush2.bf16.msra.mxu0 0
        %483 = vmatprep.subr.bf16.mxu0 0
        %484 = vmatpush2.bf16.msra.mxu0 0
        %485 = vmatprep.subr.bf16.mxu0 0
        %486 = vmatpush2.bf16.msra.mxu0 0
        %487 = vmatprep.subr.bf16.mxu0 0
        %488 = vmatpush2.bf16.msra.mxu0 0
        %489 = vmatprep.subr.bf16.mxu0 0
        %490 = vmatpush2.bf16.msra.mxu0 0
        %491 = vmatprep.mubr.bf16.mxu0 0
        %492 = vmatmul.mubr.bf16.gmra.mxu0 %v393
        %v493 = vpop.f32.mrf.mxu0
        %v494 = vadd.f32 0.0, %v493
        %v495 = vpop.f32.mrf.mxu0
        %v496 = vpop.f32.mrf.mxu0
        %v497 = vadd.f32 0.0, %v496
        %v498 = vpop.f32.mrf.mxu0
        %499 = vmatprep.mubr.bf16.mxu0 0
        %500 = vmatmul.mubr.bf16.gmra.mxu0 %v396
        %v501 = vpop.f32.mrf.mxu0
        %v502 = vadd.f32 0.0, %v501
        %v503 = vpop.f32.mrf.mxu0
        %v504 = vpop.f32.mrf.mxu0
        %v505 = vpop.f32.mrf.mxu0
        %506 = vdwg.mxu0
        %507 = vrot.lane.b32.xlu0 %v443, 1
        %v508 = vpop.permute.xlu0 %507
        %509 = vrot.lane.b32.xlu0 %v445, 1
        %v510 = vpop.permute.xlu0 %509
        %511 = vrot.lane.b32.xlu0 %v494, 1
        %v512 = vpop.permute.xlu0 %511
        %vm513 = vcmp.lt.s32.totalorder %v362, 1
        %v514 = vsel %vm513, %v510, %v512
        %v515 = vsel %vm513, %v508, %v510
        %v516 = vsel %vm513, %v512, %v508
        %v517 = vadd.f32 %v516, %v447
        %v518 = vadd.f32 %v515, %v449
        %v519 = vadd.f32 %v514, %v497
        %520 = vrot.lane.b32.xlu0 %v453, 127
        %v521 = vpop.permute.xlu0 %520
        %522 = vrot.lane.b32.xlu0 %v455, 127
        %v523 = vpop.permute.xlu0 %522
        %524 = vrot.lane.b32.xlu0 %v502, 127
        %v525 = vpop.permute.xlu0 %524
        %vm526 = vcmp.lt.s32.totalorder %v362, 127
        %v527 = vsel %vm526, %v523, %v525
        %v528 = vsel %vm526, %v521, %v523
        %v529 = vsel %vm526, %v525, %v521
        %v530 = vadd.f32 %v517, %v528
        %v531 = vadd.f32 %v518, %v527
        %v532 = vadd.f32 %v519, %v529
        %534 = vset.pattern.permute.xlu0 0
        %535 = vperm.xlu0 %534, %v354
        %v536 = vpop.permute.xlu0 %535
        %v538 = vadd.f32 %v530, %v536
        %v539 = vadd.f32 %v531, %v536
        %v540 = vadd.f32 %v532, %v536
        %v541 = vmul.f32 %v538, %v321
        %v542 = vmul.f32 %v539, %v325
        %v543 = vmul.f32 %v540, %v329
        %v544 = vadd.f32 %v541, %v542
        %v545 = vadd.f32 %v544, %v543
        %546 = vadd.xlane.f32.xlu0 %v545
        %v547 = vpop.xlane.xlu0 %546
        %vm548 = vcmask 64512
        %v550 = vsel %vm548, %v316, 0
        %552 = vmatprep.subr.mxu0 0.0
        %553 = vmatpush1.msra.mxu0 0.0
        %554 = vmatprep.subr.mxu0 0.0
        %555 = vmatpush1.msra.mxu0 0.0
        %556 = vmatprep.subr.mxu0 0.0
        %557 = vmatpush1.msra.mxu0 0.0
        %558 = vmatprep.subr.mxu0 0.0
        %559 = vmatpush1.msra.mxu0 0.0
        %560 = vmatprep.subr.mxu0 0.0
        %561 = vmatpush1.msra.mxu0 0.0
        %562 = vmatprep.subr.mxu0 0.0
        %563 = vmatpush1.msra.mxu0 0.0
        %564 = vmatprep.subr.mxu0 0.0
        %565 = vmatpush1.msra.mxu0 0.0
        %566 = vmatprep.subr.mxu0 0.0
        %567 = vmatpush1.msra.mxu0 0.0
        %568 = vmatprep.subr.mxu0 0.0
        %569 = vmatpush1.msra.mxu0 0.0
        %570 = vmatprep.subr.mxu0 0.0
        %571 = vmatpush1.msra.mxu0 0.0
        %572 = vmatprep.subr.mxu0 0.0
        %573 = vmatpush1.msra.mxu0 0.0
        %574 = vmatprep.subr.mxu0 0.0
        %575 = vmatpush1.msra.mxu0 0.0
        %576 = vmatprep.subr.mxu0 0.0
        %577 = vmatpush1.msra.mxu0 0.0
        %578 = vmatprep.subr.mxu0 0.0
        %579 = vmatpush1.msra.mxu0 0.0
        %580 = vmatprep.subr.mxu0 0.0
        %581 = vmatpush1.msra.mxu0 0.0
        %582 = vmatprep.subr.mxu0 0.0
        %583 = vmatpush1.msra.mxu0 %v547
        %584 = vmatprep.subr.mxu0 0.0
        %585 = vmatpush2.msra.mxu0 0.0
        %586 = vmatprep.subr.mxu0 0.0
        %587 = vmatpush2.msra.mxu0 0.0
        %588 = vmatprep.subr.mxu0 0.0
        %589 = vmatpush2.msra.mxu0 0.0
        %590 = vmatprep.subr.mxu0 0.0
        %591 = vmatpush2.msra.mxu0 0.0
        %592 = vmatprep.subr.mxu0 0.0
        %593 = vmatpush2.msra.mxu0 0.0
        %594 = vmatprep.subr.mxu0 0.0
        %595 = vmatpush2.msra.mxu0 0.0
        %596 = vmatprep.subr.mxu0 0.0
        %597 = vmatpush2.msra.mxu0 0.0
        %598 = vmatprep.subr.mxu0 0.0
        %599 = vmatpush2.msra.mxu0 0.0
        %600 = vmatprep.subr.mxu0 0.0
        %601 = vmatpush2.msra.mxu0 0.0
        %602 = vmatprep.subr.mxu0 0.0
        %603 = vmatpush2.msra.mxu0 0.0
        %604 = vmatprep.subr.mxu0 0.0
        %605 = vmatpush2.msra.mxu0 0.0
        %606 = vmatprep.subr.mxu0 0.0
        %607 = vmatpush2.msra.mxu0 0.0
        %608 = vmatprep.subr.mxu0 0.0
        %609 = vmatpush2.msra.mxu0 0.0
        %610 = vmatprep.subr.mxu0 0.0
        %611 = vmatpush2.msra.mxu0 0.0
        %612 = vmatprep.subr.mxu0 0.0
        %613 = vmatpush2.msra.mxu0 0.0
        %614 = vmatprep.subr.mxu0 0.0
        %615 = vmatpush2.msra.mxu0 0.0
        %616 = vmatprep.mubr.f32.mxu0 0.0
        %617 = vmatmul.mubr.f32.gmra.mxu0 %v550
        %v618 = vpop.f32.mrf.mxu0
        %v619 = vadd.f32 0.0, %v618
        %v620 = vpop.f32.mrf.mxu0
        %621 = vdwg.mxu0
        %v622 = vlaneseq
        %v623 = vshrl.u32 %v622, 7
        %v624 = vsub.s32 0, %v623
        %v625 = vrot.slane %v343, %v624
        %v626 = vmul.f32 %v619, %v625
        %628 = vset.pattern.permute.xlu0 0
        %629 = vperm.xlu0 %628, %v626
        %v630 = vpop.permute.xlu0 %629
        %v632 = vsub.f32 %v541, %v630
        %v633 = vsub.f32 %v542, %v630
        %v634 = vsub.f32 %v543, %v630
        %v635 = vmul.f32 %v632, %v321
        %v636 = vmul.f32 %v633, %v325
        %v637 = vmul.f32 %v634, %v329
        %v638 = vmul.f32 %v635, %v635
        %v639 = vmul.f32 %v636, %v636
        %v640 = vmul.f32 %v637, %v637
        %v641 = vadd.f32 %v638, %v639
        %v642 = vadd.f32 %v641, %v640
        %643 = vadd.xlane.f32.xlu0 %v642
        %v644 = vpop.xlane.xlu0 %643
        %645 = vmatprep.subr.mxu0 0.0
        %646 = vmatpush1.msra.mxu0 0.0
        %647 = vmatprep.subr.mxu0 0.0
        %648 = vmatpush1.msra.mxu0 0.0
        %649 = vmatprep.subr.mxu0 0.0
        %650 = vmatpush1.msra.mxu0 0.0
        %651 = vmatprep.subr.mxu0 0.0
        %652 = vmatpush1.msra.mxu0 0.0
        %653 = vmatprep.subr.mxu0 0.0
        %654 = vmatpush1.msra.mxu0 0.0
        %655 = vmatprep.subr.mxu0 0.0
        %656 = vmatpush1.msra.mxu0 0.0
        %657 = vmatprep.subr.mxu0 0.0
        %658 = vmatpush1.msra.mxu0 0.0
        %659 = vmatprep.subr.mxu0 0.0
        %660 = vmatpush1.msra.mxu0 0.0
        %661 = vmatprep.subr.mxu0 0.0
        %662 = vmatpush1.msra.mxu0 0.0
        %663 = vmatprep.subr.mxu0 0.0
        %664 = vmatpush1.msra.mxu0 0.0
        %665 = vmatprep.subr.mxu0 0.0
        %666 = vmatpush1.msra.mxu0 0.0
        %667 = vmatprep.subr.mxu0 0.0
        %668 = vmatpush1.msra.mxu0 0.0
        %669 = vmatprep.subr.mxu0 0.0
        %670 = vmatpush1.msra.mxu0 0.0
        %671 = vmatprep.subr.mxu0 0.0
        %672 = vmatpush1.msra.mxu0 0.0
        %673 = vmatprep.subr.mxu0 0.0
        %674 = vmatpush1.msra.mxu0 0.0
        %675 = vmatprep.subr.mxu0 0.0
        %676 = vmatpush1.msra.mxu0 %v644
        %677 = vmatprep.subr.mxu0 0.0
        %678 = vmatpush2.msra.mxu0 0.0
        %679 = vmatprep.subr.mxu0 0.0
        %680 = vmatpush2.msra.mxu0 0.0
        %681 = vmatprep.subr.mxu0 0.0
        %682 = vmatpush2.msra.mxu0 0.0
        %683 = vmatprep.subr.mxu0 0.0
        %684 = vmatpush2.msra.mxu0 0.0
        %685 = vmatprep.subr.mxu0 0.0
        %686 = vmatpush2.msra.mxu0 0.0
        %687 = vmatprep.subr.mxu0 0.0
        %688 = vmatpush2.msra.mxu0 0.0
        %689 = vmatprep.subr.mxu0 0.0
        %690 = vmatpush2.msra.mxu0 0.0
        %691 = vmatprep.subr.mxu0 0.0
        %692 = vmatpush2.msra.mxu0 0.0
        %693 = vmatprep.subr.mxu0 0.0
        %694 = vmatpush2.msra.mxu0 0.0
        %695 = vmatprep.subr.mxu0 0.0
        %696 = vmatpush2.msra.mxu0 0.0
        %697 = vmatprep.subr.mxu0 0.0
        %698 = vmatpush2.msra.mxu0 0.0
        %699 = vmatprep.subr.mxu0 0.0
        %700 = vmatpush2.msra.mxu0 0.0
        %701 = vmatprep.subr.mxu0 0.0
        %702 = vmatpush2.msra.mxu0 0.0
        %703 = vmatprep.subr.mxu0 0.0
        %704 = vmatpush2.msra.mxu0 0.0
        %705 = vmatprep.subr.mxu0 0.0
        %706 = vmatpush2.msra.mxu0 0.0
        %707 = vmatprep.subr.mxu0 0.0
        %708 = vmatpush2.msra.mxu0 0.0
        %709 = vmatprep.mubr.f32.mxu0 0.0
        %710 = vmatmul.mubr.f32.gmra.mxu0 %v550
        %v711 = vpop.f32.mrf.mxu0
        %v712 = vadd.f32 0.0, %v711
        %v713 = vpop.f32.mrf.mxu0
        %714 = vdwg.mxu0
        %v715 = vmul.f32 %v712, %v625
        %v716 = vadd.f32 %v715, 1e-05
        %v717 = vrsqrt.pop %v716
        %718 = vrot.lane.b32.xlu0 %v354, 127
        %v719 = vpop.permute.xlu0 %718
        %v721 = vmul.f32 %v717, %v719
        %v722 = vmul.f32 %v626, %v721
        %724 = vrot.lane.b32.xlu0 %v722, 2
        %v725 = vpop.permute.xlu0 %724
        %v727 = vsub.f32 %v354, %v725
        %729 = vset.pattern.permute.xlu0 0
        %730 = vperm.xlu0 %729, %v721
        %v731 = vpop.permute.xlu0 %730
        %v733 = vmul.f32 %v541, %v731
        %v734 = vmul.f32 %v542, %v731
        %v735 = vmul.f32 %v543, %v731
        %737 = vset.pattern.permute.xlu0 2
        %738 = vperm.xlu0 %737, %v727
        %v739 = vpop.permute.xlu0 %738
        %v741 = vadd.f32 %v733, %v739
        %v742 = vadd.f32 %v734, %v739
        %v743 = vadd.f32 %v735, %v739
        %v744 = vmax.f32 %v741, 0.0
        %v745 = vmax.f32 %v742, 0.0
        %v746 = vmax.f32 %v743, 0.0
        %v747 = vmul.f32 %v744, %v321
        %v748 = vmul.f32 %v745, %v325
        %v749 = vmul.f32 %v746, %v329
        %750 = vrot.lane.b32.xlu0 %v747, 18
        %v751 = vpop.permute.xlu0 %750
        %752 = vrot.lane.b32.xlu0 %v748, 18
        %v753 = vpop.permute.xlu0 %752
        %754 = vrot.lane.b32.xlu0 %v749, 18
        %v755 = vpop.permute.xlu0 %754
        %v756 = vsel %vm363, %v753, %v755
        %v757 = vsel %vm363, %v751, %v753
        %v758 = vsel %vm363, %v755, %v751
        %759 = vrot.lane.b32.xlu0 %v747, 110
        %v760 = vpop.permute.xlu0 %759
        %761 = vrot.lane.b32.xlu0 %v748, 110
        %v762 = vpop.permute.xlu0 %761
        %763 = vrot.lane.b32.xlu0 %v749, 110
        %v764 = vpop.permute.xlu0 %763
        %v765 = vsel %vm373, %v762, %v764
        %v766 = vsel %vm373, %v760, %v762
        %v767 = vsel %vm373, %v764, %v760
        %v768 = vpack.c.bf16 %v747, %v758
        %v769 = vpack.c.bf16 %v748, %v757
        %v770 = vpack.c.bf16 %v749, %v756
        %v771 = vpack.c.bf16 %v766, %v766
        %v772 = vpack.c.bf16 %v765, %v765
        %v773 = vpack.c.bf16 %v767, %v767
        %v777 = vunpack.c.l.b16 %v348
        %v778 = vunpack.c.l.b16 %v349
        %v779 = vunpack.c.l.b16 %v350
        %v780 = vpack.c.b16 %v778, %v777
        %v781 = vpack.c.b16 %v779, %v779
        %v783 = vsel %vm391, %v780, 0
        %v786 = vsel %vm391, %v781, 0
        %v789 = vsel %vm398, %v771, 0
        %v792 = vsel %vm398, %v772, 0
        %v795 = vsel %vm398, %v773, 0
        %797 = vmatprep.subr.bf16.mxu0 0
        %798 = vmatpush1.bf16.msra.mxu0 0
        %799 = vmatprep.subr.bf16.mxu0 0
        %800 = vmatpush1.bf16.msra.mxu0 0
        %801 = vmatprep.subr.bf16.mxu0 0
        %802 = vmatpush1.bf16.msra.mxu0 0
        %803 = vmatprep.subr.bf16.mxu0 0
        %804 = vmatpush1.bf16.msra.mxu0 0
        %805 = vmatprep.subr.bf16.mxu0 0
        %806 = vmatpush1.bf16.msra.mxu0 0
        %807 = vmatprep.subr.bf16.mxu0 0
        %808 = vmatpush1.bf16.msra.mxu0 0
        %809 = vmatprep.subr.bf16.mxu0 %v792
        %810 = vmatpush1.bf16.msra.mxu0 %v789
        %811 = vmatprep.subr.bf16.mxu0 %v769
        %812 = vmatpush1.bf16.msra.mxu0 %v768
        %813 = vmatprep.subr.bf16.mxu0 0
        %814 = vmatpush2.bf16.msra.mxu0 0
        %815 = vmatprep.subr.bf16.mxu0 0
        %816 = vmatpush2.bf16.msra.mxu0 0
        %817 = vmatprep.subr.bf16.mxu0 0
        %818 = vmatpush2.bf16.msra.mxu0 0
        %819 = vmatprep.subr.bf16.mxu0 0
        %820 = vmatpush2.bf16.msra.mxu0 0
        %821 = vmatprep.subr.bf16.mxu0 0
        %822 = vmatpush2.bf16.msra.mxu0 0
        %823 = vmatprep.subr.bf16.mxu0 0
        %824 = vmatpush2.bf16.msra.mxu0 0
        %825 = vmatprep.subr.bf16.mxu0 0
        %826 = vmatpush2.bf16.msra.mxu0 0
        %827 = vmatprep.subr.bf16.mxu0 0
        %828 = vmatpush2.bf16.msra.mxu0 0
        %829 = vmatprep.mubr.bf16.mxu0 0
        %830 = vmatmul.mubr.bf16.gmra.mxu0 %v783
        %v831 = vpop.f32.mrf.mxu0
        %v832 = vadd.f32 0.0, %v831
        %v833 = vpop.f32.mrf.mxu0
        %v834 = vadd.f32 0.0, %v833
        %v835 = vpop.f32.mrf.mxu0
        %v836 = vadd.f32 0.0, %v835
        %v837 = vpop.f32.mrf.mxu0
        %v838 = vadd.f32 0.0, %v837
        %839 = vmatprep.mubr.bf16.mxu0 0
        %840 = vmatmul.mubr.bf16.gmra.mxu0 %v786
        %v841 = vpop.f32.mrf.mxu0
        %v842 = vadd.f32 0.0, %v841
        %v843 = vpop.f32.mrf.mxu0
        %v844 = vadd.f32 0.0, %v843
        %v845 = vpop.f32.mrf.mxu0
        %v846 = vpop.f32.mrf.mxu0
        %847 = vdwg.mxu0
        %848 = vmatprep.subr.bf16.mxu0 0
        %849 = vmatpush1.bf16.msra.mxu0 0
        %850 = vmatprep.subr.bf16.mxu0 0
        %851 = vmatpush1.bf16.msra.mxu0 0
        %852 = vmatprep.subr.bf16.mxu0 0
        %853 = vmatpush1.bf16.msra.mxu0 0
        %854 = vmatprep.subr.bf16.mxu0 0
        %855 = vmatpush1.bf16.msra.mxu0 0
        %856 = vmatprep.subr.bf16.mxu0 0
        %857 = vmatpush1.bf16.msra.mxu0 0
        %858 = vmatprep.subr.bf16.mxu0 0
        %859 = vmatpush1.bf16.msra.mxu0 0
        %860 = vmatprep.subr.bf16.mxu0 0
        %861 = vmatpush1.bf16.msra.mxu0 %v795
        %862 = vmatprep.subr.bf16.mxu0 0
        %863 = vmatpush1.bf16.msra.mxu0 %v770
        %864 = vmatprep.subr.bf16.mxu0 0
        %865 = vmatpush2.bf16.msra.mxu0 0
        %866 = vmatprep.subr.bf16.mxu0 0
        %867 = vmatpush2.bf16.msra.mxu0 0
        %868 = vmatprep.subr.bf16.mxu0 0
        %869 = vmatpush2.bf16.msra.mxu0 0
        %870 = vmatprep.subr.bf16.mxu0 0
        %871 = vmatpush2.bf16.msra.mxu0 0
        %872 = vmatprep.subr.bf16.mxu0 0
        %873 = vmatpush2.bf16.msra.mxu0 0
        %874 = vmatprep.subr.bf16.mxu0 0
        %875 = vmatpush2.bf16.msra.mxu0 0
        %876 = vmatprep.subr.bf16.mxu0 0
        %877 = vmatpush2.bf16.msra.mxu0 0
        %878 = vmatprep.subr.bf16.mxu0 0
        %879 = vmatpush2.bf16.msra.mxu0 0
        %880 = vmatprep.mubr.bf16.mxu0 0
        %881 = vmatmul.mubr.bf16.gmra.mxu0 %v783
        %v882 = vpop.f32.mrf.mxu0
        %v883 = vadd.f32 0.0, %v882
        %v884 = vpop.f32.mrf.mxu0
        %v885 = vpop.f32.mrf.mxu0
        %v886 = vadd.f32 0.0, %v885
        %v887 = vpop.f32.mrf.mxu0
        %888 = vmatprep.mubr.bf16.mxu0 0
        %889 = vmatmul.mubr.bf16.gmra.mxu0 %v786
        %v890 = vpop.f32.mrf.mxu0
        %v891 = vadd.f32 0.0, %v890
        %v892 = vpop.f32.mrf.mxu0
        %v893 = vpop.f32.mrf.mxu0
        %v894 = vpop.f32.mrf.mxu0
        %895 = vdwg.mxu0
        %896 = vrot.lane.b32.xlu0 %v832, 1
        %v897 = vpop.permute.xlu0 %896
        %898 = vrot.lane.b32.xlu0 %v834, 1
        %v899 = vpop.permute.xlu0 %898
        %900 = vrot.lane.b32.xlu0 %v883, 1
        %v901 = vpop.permute.xlu0 %900
        %v902 = vsel %vm513, %v899, %v901
        %v903 = vsel %vm513, %v897, %v899
        %v904 = vsel %vm513, %v901, %v897
        %v905 = vadd.f32 %v904, %v836
        %v906 = vadd.f32 %v903, %v838
        %v907 = vadd.f32 %v902, %v886
        %908 = vrot.lane.b32.xlu0 %v842, 127
        %v909 = vpop.permute.xlu0 %908
        %910 = vrot.lane.b32.xlu0 %v844, 127
        %v911 = vpop.permute.xlu0 %910
        %912 = vrot.lane.b32.xlu0 %v891, 127
        %v913 = vpop.permute.xlu0 %912
        %v914 = vsel %vm526, %v911, %v913
        %v915 = vsel %vm526, %v909, %v911
        %v916 = vsel %vm526, %v913, %v909
        %v917 = vadd.f32 %v905, %v915
        %v918 = vadd.f32 %v906, %v914
        %v919 = vadd.f32 %v907, %v916
        %v920 = vmul.f32 %v917, %v321
        %v921 = vmul.f32 %v918, %v325
        %v922 = vmul.f32 %v919, %v329
        %v923 = vadd.f32 %v920, %v921
        %v924 = vadd.f32 %v923, %v922
        %925 = vadd.xlane.f32.xlu0 %v924
        %v926 = vpop.xlane.xlu0 %925
        %927 = vmatprep.subr.mxu0 0.0
        %928 = vmatpush1.msra.mxu0 0.0
        %929 = vmatprep.subr.mxu0 0.0
        %930 = vmatpush1.msra.mxu0 0.0
        %931 = vmatprep.subr.mxu0 0.0
        %932 = vmatpush1.msra.mxu0 0.0
        %933 = vmatprep.subr.mxu0 0.0
        %934 = vmatpush1.msra.mxu0 0.0
        %935 = vmatprep.subr.mxu0 0.0
        %936 = vmatpush1.msra.mxu0 0.0
        %937 = vmatprep.subr.mxu0 0.0
        %938 = vmatpush1.msra.mxu0 0.0
        %939 = vmatprep.subr.mxu0 0.0
        %940 = vmatpush1.msra.mxu0 0.0
        %941 = vmatprep.subr.mxu0 0.0
        %942 = vmatpush1.msra.mxu0 0.0
        %943 = vmatprep.subr.mxu0 0.0
        %944 = vmatpush1.msra.mxu0 0.0
        %945 = vmatprep.subr.mxu0 0.0
        %946 = vmatpush1.msra.mxu0 0.0
        %947 = vmatprep.subr.mxu0 0.0
        %948 = vmatpush1.msra.mxu0 0.0
        %949 = vmatprep.subr.mxu0 0.0
        %950 = vmatpush1.msra.mxu0 0.0
        %951 = vmatprep.subr.mxu0 0.0
        %952 = vmatpush1.msra.mxu0 0.0
        %953 = vmatprep.subr.mxu0 0.0
        %954 = vmatpush1.msra.mxu0 0.0
        %955 = vmatprep.subr.mxu0 0.0
        %956 = vmatpush1.msra.mxu0 0.0
        %957 = vmatprep.subr.mxu0 0.0
        %958 = vmatpush1.msra.mxu0 %v926
        %959 = vmatprep.subr.mxu0 0.0
        %960 = vmatpush2.msra.mxu0 0.0
        %961 = vmatprep.subr.mxu0 0.0
        %962 = vmatpush2.msra.mxu0 0.0
        %963 = vmatprep.subr.mxu0 0.0
        %964 = vmatpush2.msra.mxu0 0.0
        %965 = vmatprep.subr.mxu0 0.0
        %966 = vmatpush2.msra.mxu0 0.0
        %967 = vmatprep.subr.mxu0 0.0
        %968 = vmatpush2.msra.mxu0 0.0
        %969 = vmatprep.subr.mxu0 0.0
        %970 = vmatpush2.msra.mxu0 0.0
        %971 = vmatprep.subr.mxu0 0.0
        %972 = vmatpush2.msra.mxu0 0.0
        %973 = vmatprep.subr.mxu0 0.0
        %974 = vmatpush2.msra.mxu0 0.0
        %975 = vmatprep.subr.mxu0 0.0
        %976 = vmatpush2.msra.mxu0 0.0
        %977 = vmatprep.subr.mxu0 0.0
        %978 = vmatpush2.msra.mxu0 0.0
        %979 = vmatprep.subr.mxu0 0.0
        %980 = vmatpush2.msra.mxu0 0.0
        %981 = vmatprep.subr.mxu0 0.0
        %982 = vmatpush2.msra.mxu0 0.0
        %983 = vmatprep.subr.mxu0 0.0
        %984 = vmatpush2.msra.mxu0 0.0
        %985 = vmatprep.subr.mxu0 0.0
        %986 = vmatpush2.msra.mxu0 0.0
        %987 = vmatprep.subr.mxu0 0.0
        %988 = vmatpush2.msra.mxu0 0.0
        %989 = vmatprep.subr.mxu0 0.0
        %990 = vmatpush2.msra.mxu0 0.0
        %991 = vmatprep.mubr.f32.mxu0 0.0
        %992 = vmatmul.mubr.f32.gmra.mxu0 %v550
        %v993 = vpop.f32.mrf.mxu0
        %v994 = vadd.f32 0.0, %v993
        %v995 = vpop.f32.mrf.mxu0
        %996 = vdwg.mxu0
        %v997 = vmul.f32 %v994, %v625
        %999 = vset.pattern.permute.xlu0 0
        %1000 = vperm.xlu0 %999, %v997
        %v1001 = vpop.permute.xlu0 %1000
        %v1003 = vsub.f32 %v920, %v1001
        %v1004 = vsub.f32 %v921, %v1001
        %v1005 = vsub.f32 %v922, %v1001
        %v1006 = vmul.f32 %v1003, %v321
        %v1007 = vmul.f32 %v1004, %v325
        %v1008 = vmul.f32 %v1005, %v329
        %v1009 = vmul.f32 %v1006, %v1006
        %v1010 = vmul.f32 %v1007, %v1007
        %v1011 = vmul.f32 %v1008, %v1008
        %v1012 = vadd.f32 %v1009, %v1010
        %v1013 = vadd.f32 %v1012, %v1011
        %1014 = vadd.xlane.f32.xlu0 %v1013
        %v1015 = vpop.xlane.xlu0 %1014
        %1016 = vmatprep.subr.mxu0 0.0
        %1017 = vmatpush1.msra.mxu0 0.0
        %1018 = vmatprep.subr.mxu0 0.0
        %1019 = vmatpush1.msra.mxu0 0.0
        %1020 = vmatprep.subr.mxu0 0.0
        %1021 = vmatpush1.msra.mxu0 0.0
        %1022 = vmatprep.subr.mxu0 0.0
        %1023 = vmatpush1.msra.mxu0 0.0
        %1024 = vmatprep.subr.mxu0 0.0
        %1025 = vmatpush1.msra.mxu0 0.0
        %1026 = vmatprep.subr.mxu0 0.0
        %1027 = vmatpush1.msra.mxu0 0.0
        %1028 = vmatprep.subr.mxu0 0.0
        %1029 = vmatpush1.msra.mxu0 0.0
        %1030 = vmatprep.subr.mxu0 0.0
        %1031 = vmatpush1.msra.mxu0 0.0
        %1032 = vmatprep.subr.mxu0 0.0
        %1033 = vmatpush1.msra.mxu0 0.0
        %1034 = vmatprep.subr.mxu0 0.0
        %1035 = vmatpush1.msra.mxu0 0.0
        %1036 = vmatprep.subr.mxu0 0.0
        %1037 = vmatpush1.msra.mxu0 0.0
        %1038 = vmatprep.subr.mxu0 0.0
        %1039 = vmatpush1.msra.mxu0 0.0
        %1040 = vmatprep.subr.mxu0 0.0
        %1041 = vmatpush1.msra.mxu0 0.0
        %1042 = vmatprep.subr.mxu0 0.0
        %1043 = vmatpush1.msra.mxu0 0.0
        %1044 = vmatprep.subr.mxu0 0.0
        %1045 = vmatpush1.msra.mxu0 0.0
        %1046 = vmatprep.subr.mxu0 0.0
        %1047 = vmatpush1.msra.mxu0 %v1015
        %1048 = vmatprep.subr.mxu0 0.0
        %1049 = vmatpush2.msra.mxu0 0.0
        %1050 = vmatprep.subr.mxu0 0.0
        %1051 = vmatpush2.msra.mxu0 0.0
        %1052 = vmatprep.subr.mxu0 0.0
        %1053 = vmatpush2.msra.mxu0 0.0
        %1054 = vmatprep.subr.mxu0 0.0
        %1055 = vmatpush2.msra.mxu0 0.0
        %1056 = vmatprep.subr.mxu0 0.0
        %1057 = vmatpush2.msra.mxu0 0.0
        %1058 = vmatprep.subr.mxu0 0.0
        %1059 = vmatpush2.msra.mxu0 0.0
        %1060 = vmatprep.subr.mxu0 0.0
        %1061 = vmatpush2.msra.mxu0 0.0
        %1062 = vmatprep.subr.mxu0 0.0
        %1063 = vmatpush2.msra.mxu0 0.0
        %1064 = vmatprep.subr.mxu0 0.0
        %1065 = vmatpush2.msra.mxu0 0.0
        %1066 = vmatprep.subr.mxu0 0.0
        %1067 = vmatpush2.msra.mxu0 0.0
        %1068 = vmatprep.subr.mxu0 0.0
        %1069 = vmatpush2.msra.mxu0 0.0
        %1070 = vmatprep.subr.mxu0 0.0
        %1071 = vmatpush2.msra.mxu0 0.0
        %1072 = vmatprep.subr.mxu0 0.0
        %1073 = vmatpush2.msra.mxu0 0.0
        %1074 = vmatprep.subr.mxu0 0.0
        %1075 = vmatpush2.msra.mxu0 0.0
        %1076 = vmatprep.subr.mxu0 0.0
        %1077 = vmatpush2.msra.mxu0 0.0
        %1078 = vmatprep.subr.mxu0 0.0
        %1079 = vmatpush2.msra.mxu0 0.0
        %1080 = vmatprep.mubr.f32.mxu0 0.0
        %1081 = vmatmul.mubr.f32.gmra.mxu0 %v550
        %v1082 = vpop.f32.mrf.mxu0
        %v1083 = vadd.f32 0.0, %v1082
        %v1084 = vpop.f32.mrf.mxu0
        %1085 = vdwg.mxu0
        %v1086 = vmul.f32 %v1083, %v625
        %v1087 = vadd.f32 %v1086, 1e-05
        %v1088 = vrsqrt.pop %v1087
        %1089 = vrot.lane.b32.xlu0 %v316, 120
        %v1090 = vpop.permute.xlu0 %1089
        %v1092 = vmul.f32 %v1088, %v1090
        %v1093 = vmul.f32 %v997, %v1092
        %1095 = vrot.lane.b32.xlu0 %v1093, 9
        %v1096 = vpop.permute.xlu0 %1095
        %v1098 = vsub.f32 %v316, %v1096
        %1100 = vset.pattern.permute.xlu0 0
        %1101 = vperm.xlu0 %1100, %v1092
        %v1102 = vpop.permute.xlu0 %1101
        %v1104 = vmul.f32 %v920, %v1102
        %v1105 = vmul.f32 %v921, %v1102
        %v1106 = vmul.f32 %v922, %v1102
        %v1107 = vadd.f32 %v351, %v1104
        %v1108 = vadd.f32 %v352, %v1105
        %v1109 = vadd.f32 %v353, %v1106
        %1111 = vset.pattern.permute.xlu0 9
        %1112 = vperm.xlu0 %1111, %v1098
        %v1113 = vpop.permute.xlu0 %1112
        %v1115 = vadd.f32 %v1107, %v1113
        %v1116 = vadd.f32 %v1108, %v1113
        %v1117 = vadd.f32 %v1109, %v1113
        %1118 = vst [vmem:[%s310] sm:$0xff] %v1115
        %1119 = vst [vmem:[%s310 + $0x8] sm:$0xff] %v1116
        %1120 = vst [vmem:[%s310 + $0x10] sm:$0xff] %v1117
        %s1121 = scalar_lea.vmem %s262, 24 [#allocation2]
        %v1122 = vld [vmem:[%s1121] sm:$0xff]
        %v1123 = vld [vmem:[%s1121 + $0x8] sm:$0xff]
        %v1124 = vld [vmem:[%s1121 + $0x10] sm:$0xff]
        %s1125 = scalar_lea.vmem %s271, 8 [#allocation5]
        %v1126 = vld [vmem:[%s1125] sm:$0xff]
        %1127 = vrot.lane.b32.xlu0 %v1122, 18
        %v1128 = vpop.permute.xlu0 %1127
        %1129 = vrot.lane.b32.xlu0 %v1123, 18
        %v1130 = vpop.permute.xlu0 %1129
        %1131 = vrot.lane.b32.xlu0 %v1124, 18
        %v1132 = vpop.permute.xlu0 %1131
        %v1133 = vsel %vm363, %v1130, %v1132
        %v1134 = vsel %vm363, %v1128, %v1130
        %v1135 = vsel %vm363, %v1132, %v1128
        %1136 = vrot.lane.b32.xlu0 %v1122, 110
        %v1137 = vpop.permute.xlu0 %1136
        %1138 = vrot.lane.b32.xlu0 %v1123, 110
        %v1139 = vpop.permute.xlu0 %1138
        %1140 = vrot.lane.b32.xlu0 %v1124, 110
        %v1141 = vpop.permute.xlu0 %1140
        %v1142 = vsel %vm373, %v1139, %v1141
        %v1143 = vsel %vm373, %v1137, %v1139
        %v1144 = vsel %vm373, %v1141, %v1137
        %v1145 = vpack.c.bf16 %v1122, %v1135
        %v1146 = vpack.c.bf16 %v1123, %v1134
        %v1147 = vpack.c.bf16 %v1124, %v1133
        %v1148 = vpack.c.bf16 %v1143, %v1143
        %v1149 = vpack.c.bf16 %v1142, %v1142
        %v1150 = vpack.c.bf16 %v1144, %v1144
        %v1152 = vsel %vm398, %v1148, 0
        %v1155 = vsel %vm398, %v1149, 0
        %v1158 = vsel %vm398, %v1150, 0
        %1160 = vmatprep.subr.bf16.mxu0 0
        %1161 = vmatpush1.bf16.msra.mxu0 0
        %1162 = vmatprep.subr.bf16.mxu0 0
        %1163 = vmatpush1.bf16.msra.mxu0 0
        %1164 = vmatprep.subr.bf16.mxu0 0
        %1165 = vmatpush1.bf16.msra.mxu0 0
        %1166 = vmatprep.subr.bf16.mxu0 0
        %1167 = vmatpush1.bf16.msra.mxu0 0
        %1168 = vmatprep.subr.bf16.mxu0 0
        %1169 = vmatpush1.bf16.msra.mxu0 0
        %1170 = vmatprep.subr.bf16.mxu0 0
        %1171 = vmatpush1.bf16.msra.mxu0 0
        %1172 = vmatprep.subr.bf16.mxu0 %v1155
        %1173 = vmatpush1.bf16.msra.mxu0 %v1152
        %1174 = vmatprep.subr.bf16.mxu0 %v1146
        %1175 = vmatpush1.bf16.msra.mxu0 %v1145
        %1176 = vmatprep.subr.bf16.mxu0 0
        %1177 = vmatpush2.bf16.msra.mxu0 0
        %1178 = vmatprep.subr.bf16.mxu0 0
        %1179 = vmatpush2.bf16.msra.mxu0 0
        %1180 = vmatprep.subr.bf16.mxu0 0
        %1181 = vmatpush2.bf16.msra.mxu0 0
        %1182 = vmatprep.subr.bf16.mxu0 0
        %1183 = vmatpush2.bf16.msra.mxu0 0
        %1184 = vmatprep.subr.bf16.mxu0 0
        %1185 = vmatpush2.bf16.msra.mxu0 0
        %1186 = vmatprep.subr.bf16.mxu0 0
        %1187 = vmatpush2.bf16.msra.mxu0 0
        %1188 = vmatprep.subr.bf16.mxu0 0
        %1189 = vmatpush2.bf16.msra.mxu0 0
        %1190 = vmatprep.subr.bf16.mxu0 0
        %1191 = vmatpush2.bf16.msra.mxu0 0
        %1192 = vmatprep.mubr.bf16.mxu0 0
        %1193 = vmatmul.mubr.bf16.gmra.mxu0 %v393
        %v1194 = vpop.f32.mrf.mxu0
        %v1195 = vadd.f32 0.0, %v1194
        %v1196 = vpop.f32.mrf.mxu0
        %v1197 = vadd.f32 0.0, %v1196
        %v1198 = vpop.f32.mrf.mxu0
        %v1199 = vadd.f32 0.0, %v1198
        %v1200 = vpop.f32.mrf.mxu0
        %v1201 = vadd.f32 0.0, %v1200
        %1202 = vmatprep.mubr.bf16.mxu0 0
        %1203 = vmatmul.mubr.bf16.gmra.mxu0 %v396
        %v1204 = vpop.f32.mrf.mxu0
        %v1205 = vadd.f32 0.0, %v1204
        %v1206 = vpop.f32.mrf.mxu0
        %v1207 = vadd.f32 0.0, %v1206
        %v1208 = vpop.f32.mrf.mxu0
        %v1209 = vpop.f32.mrf.mxu0
        %1210 = vdwg.mxu0
        %1211 = vmatprep.subr.bf16.mxu0 0
        %1212 = vmatpush1.bf16.msra.mxu0 0
        %1213 = vmatprep.subr.bf16.mxu0 0
        %1214 = vmatpush1.bf16.msra.mxu0 0
        %1215 = vmatprep.subr.bf16.mxu0 0
        %1216 = vmatpush1.bf16.msra.mxu0 0
        %1217 = vmatprep.subr.bf16.mxu0 0
        %1218 = vmatpush1.bf16.msra.mxu0 0
        %1219 = vmatprep.subr.bf16.mxu0 0
        %1220 = vmatpush1.bf16.msra.mxu0 0
        %1221 = vmatprep.subr.bf16.mxu0 0
        %1222 = vmatpush1.bf16.msra.mxu0 0
        %1223 = vmatprep.subr.bf16.mxu0 0
        %1224 = vmatpush1.bf16.msra.mxu0 %v1158
        %1225 = vmatprep.subr.bf16.mxu0 0
        %1226 = vmatpush1.bf16.msra.mxu0 %v1147
        %1227 = vmatprep.subr.bf16.mxu0 0
        %1228 = vmatpush2.bf16.msra.mxu0 0
        %1229 = vmatprep.subr.bf16.mxu0 0
        %1230 = vmatpush2.bf16.msra.mxu0 0
        %1231 = vmatprep.subr.bf16.mxu0 0
        %1232 = vmatpush2.bf16.msra.mxu0 0
        %1233 = vmatprep.subr.bf16.mxu0 0
        %1234 = vmatpush2.bf16.msra.mxu0 0
        %1235 = vmatprep.subr.bf16.mxu0 0
        %1236 = vmatpush2.bf16.msra.mxu0 0
        %1237 = vmatprep.subr.bf16.mxu0 0
        %1238 = vmatpush2.bf16.msra.mxu0 0
        %1239 = vmatprep.subr.bf16.mxu0 0
        %1240 = vmatpush2.bf16.msra.mxu0 0
        %1241 = vmatprep.subr.bf16.mxu0 0
        %1242 = vmatpush2.bf16.msra.mxu0 0
        %1243 = vmatprep.mubr.bf16.mxu0 0
        %1244 = vmatmul.mubr.bf16.gmra.mxu0 %v393
        %v1245 = vpop.f32.mrf.mxu0
        %v1246 = vadd.f32 0.0, %v1245
        %v1247 = vpop.f32.mrf.mxu0
        %v1248 = vpop.f32.mrf.mxu0
        %v1249 = vadd.f32 0.0, %v1248
        %v1250 = vpop.f32.mrf.mxu0
        %1251 = vmatprep.mubr.bf16.mxu0 0
        %1252 = vmatmul.mubr.bf16.gmra.mxu0 %v396
        %v1253 = vpop.f32.mrf.mxu0
        %v1254 = vadd.f32 0.0, %v1253
        %v1255 = vpop.f32.mrf.mxu0
        %v1256 = vpop.f32.mrf.mxu0
        %v1257 = vpop.f32.mrf.mxu0
        %1258 = vdwg.mxu0
        %1259 = vrot.lane.b32.xlu0 %v1195, 1
        %v1260 = vpop.permute.xlu0 %1259
        %1261 = vrot.lane.b32.xlu0 %v1197, 1
        %v1262 = vpop.permute.xlu0 %1261
        %1263 = vrot.lane.b32.xlu0 %v1246, 1
        %v1264 = vpop.permute.xlu0 %1263
        %v1265 = vsel %vm513, %v1262, %v1264
        %v1266 = vsel %vm513, %v1260, %v1262
        %v1267 = vsel %vm513, %v1264, %v1260
        %v1268 = vadd.f32 %v1267, %v1199
        %v1269 = vadd.f32 %v1266, %v1201
        %v1270 = vadd.f32 %v1265, %v1249
        %1271 = vrot.lane.b32.xlu0 %v1205, 127
        %v1272 = vpop.permute.xlu0 %1271
        %1273 = vrot.lane.b32.xlu0 %v1207, 127
        %v1274 = vpop.permute.xlu0 %1273
        %1275 = vrot.lane.b32.xlu0 %v1254, 127
        %v1276 = vpop.permute.xlu0 %1275
        %v1277 = vsel %vm526, %v1274, %v1276
        %v1278 = vsel %vm526, %v1272, %v1274
        %v1279 = vsel %vm526, %v1276, %v1272
        %v1280 = vadd.f32 %v1268, %v1278
        %v1281 = vadd.f32 %v1269, %v1277
        %v1282 = vadd.f32 %v1270, %v1279
        %1284 = vset.pattern.permute.xlu0 0
        %1285 = vperm.xlu0 %1284, %v1126
        %v1286 = vpop.permute.xlu0 %1285
        %v1288 = vadd.f32 %v1280, %v1286
        %v1289 = vadd.f32 %v1281, %v1286
        %v1290 = vadd.f32 %v1282, %v1286
        %v1291 = vmul.f32 %v1288, %v321
        %v1292 = vmul.f32 %v1289, %v325
        %v1293 = vmul.f32 %v1290, %v329
        %v1294 = vadd.f32 %v1291, %v1292
        %v1295 = vadd.f32 %v1294, %v1293
        %1296 = vadd.xlane.f32.xlu0 %v1295
        %v1297 = vpop.xlane.xlu0 %1296
        %1298 = vmatprep.subr.mxu0 0.0
        %1299 = vmatpush1.msra.mxu0 0.0
        %1300 = vmatprep.subr.mxu0 0.0
        %1301 = vmatpush1.msra.mxu0 0.0
        %1302 = vmatprep.subr.mxu0 0.0
        %1303 = vmatpush1.msra.mxu0 0.0
        %1304 = vmatprep.subr.mxu0 0.0
        %1305 = vmatpush1.msra.mxu0 0.0
        %1306 = vmatprep.subr.mxu0 0.0
        %1307 = vmatpush1.msra.mxu0 0.0
        %1308 = vmatprep.subr.mxu0 0.0
        %1309 = vmatpush1.msra.mxu0 0.0
        %1310 = vmatprep.subr.mxu0 0.0
        %1311 = vmatpush1.msra.mxu0 0.0
        %1312 = vmatprep.subr.mxu0 0.0
        %1313 = vmatpush1.msra.mxu0 0.0
        %1314 = vmatprep.subr.mxu0 0.0
        %1315 = vmatpush1.msra.mxu0 0.0
        %1316 = vmatprep.subr.mxu0 0.0
        %1317 = vmatpush1.msra.mxu0 0.0
        %1318 = vmatprep.subr.mxu0 0.0
        %1319 = vmatpush1.msra.mxu0 0.0
        %1320 = vmatprep.subr.mxu0 0.0
        %1321 = vmatpush1.msra.mxu0 0.0
        %1322 = vmatprep.subr.mxu0 0.0
        %1323 = vmatpush1.msra.mxu0 0.0
        %1324 = vmatprep.subr.mxu0 0.0
        %1325 = vmatpush1.msra.mxu0 0.0
        %1326 = vmatprep.subr.mxu0 0.0
        %1327 = vmatpush1.msra.mxu0 0.0
        %1328 = vmatprep.subr.mxu0 0.0
        %1329 = vmatpush1.msra.mxu0 %v1297
        %1330 = vmatprep.subr.mxu0 0.0
        %1331 = vmatpush2.msra.mxu0 0.0
        %1332 = vmatprep.subr.mxu0 0.0
        %1333 = vmatpush2.msra.mxu0 0.0
        %1334 = vmatprep.subr.mxu0 0.0
        %1335 = vmatpush2.msra.mxu0 0.0
        %1336 = vmatprep.subr.mxu0 0.0
        %1337 = vmatpush2.msra.mxu0 0.0
        %1338 = vmatprep.subr.mxu0 0.0
        %1339 = vmatpush2.msra.mxu0 0.0
        %1340 = vmatprep.subr.mxu0 0.0
        %1341 = vmatpush2.msra.mxu0 0.0
        %1342 = vmatprep.subr.mxu0 0.0
        %1343 = vmatpush2.msra.mxu0 0.0
        %1344 = vmatprep.subr.mxu0 0.0
        %1345 = vmatpush2.msra.mxu0 0.0
        %1346 = vmatprep.subr.mxu0 0.0
        %1347 = vmatpush2.msra.mxu0 0.0
        %1348 = vmatprep.subr.mxu0 0.0
        %1349 = vmatpush2.msra.mxu0 0.0
        %1350 = vmatprep.subr.mxu0 0.0
        %1351 = vmatpush2.msra.mxu0 0.0
        %1352 = vmatprep.subr.mxu0 0.0
        %1353 = vmatpush2.msra.mxu0 0.0
        %1354 = vmatprep.subr.mxu0 0.0
        %1355 = vmatpush2.msra.mxu0 0.0
        %1356 = vmatprep.subr.mxu0 0.0
        %1357 = vmatpush2.msra.mxu0 0.0
        %1358 = vmatprep.subr.mxu0 0.0
        %1359 = vmatpush2.msra.mxu0 0.0
        %1360 = vmatprep.subr.mxu0 0.0
        %1361 = vmatpush2.msra.mxu0 0.0
        %1362 = vmatprep.mubr.f32.mxu0 0.0
        %1363 = vmatmul.mubr.f32.gmra.mxu0 %v550
        %v1364 = vpop.f32.mrf.mxu0
        %v1365 = vadd.f32 0.0, %v1364
        %v1366 = vpop.f32.mrf.mxu0
        %1367 = vdwg.mxu0
        %v1368 = vmul.f32 %v1365, %v625
        %1370 = vset.pattern.permute.xlu0 0
        %1371 = vperm.xlu0 %1370, %v1368
        %v1372 = vpop.permute.xlu0 %1371
        %v1374 = vsub.f32 %v1291, %v1372
        %v1375 = vsub.f32 %v1292, %v1372
        %v1376 = vsub.f32 %v1293, %v1372
        %v1377 = vmul.f32 %v1374, %v321
        %v1378 = vmul.f32 %v1375, %v325
        %v1379 = vmul.f32 %v1376, %v329
        %v1380 = vmul.f32 %v1377, %v1377
        %v1381 = vmul.f32 %v1378, %v1378
        %v1382 = vmul.f32 %v1379, %v1379
        %v1383 = vadd.f32 %v1380, %v1381
        %v1384 = vadd.f32 %v1383, %v1382
        %1385 = vadd.xlane.f32.xlu0 %v1384
        %v1386 = vpop.xlane.xlu0 %1385
        %1387 = vmatprep.subr.mxu0 0.0
        %1388 = vmatpush1.msra.mxu0 0.0
        %1389 = vmatprep.subr.mxu0 0.0
        %1390 = vmatpush1.msra.mxu0 0.0
        %1391 = vmatprep.subr.mxu0 0.0
        %1392 = vmatpush1.msra.mxu0 0.0
        %1393 = vmatprep.subr.mxu0 0.0
        %1394 = vmatpush1.msra.mxu0 0.0
        %1395 = vmatprep.subr.mxu0 0.0
        %1396 = vmatpush1.msra.mxu0 0.0
        %1397 = vmatprep.subr.mxu0 0.0
        %1398 = vmatpush1.msra.mxu0 0.0
        %1399 = vmatprep.subr.mxu0 0.0
        %1400 = vmatpush1.msra.mxu0 0.0
        %1401 = vmatprep.subr.mxu0 0.0
        %1402 = vmatpush1.msra.mxu0 0.0
        %1403 = vmatprep.subr.mxu0 0.0
        %1404 = vmatpush1.msra.mxu0 0.0
        %1405 = vmatprep.subr.mxu0 0.0
        %1406 = vmatpush1.msra.mxu0 0.0
        %1407 = vmatprep.subr.mxu0 0.0
        %1408 = vmatpush1.msra.mxu0 0.0
        %1409 = vmatprep.subr.mxu0 0.0
        %1410 = vmatpush1.msra.mxu0 0.0
        %1411 = vmatprep.subr.mxu0 0.0
        %1412 = vmatpush1.msra.mxu0 0.0
        %1413 = vmatprep.subr.mxu0 0.0
        %1414 = vmatpush1.msra.mxu0 0.0
        %1415 = vmatprep.subr.mxu0 0.0
        %1416 = vmatpush1.msra.mxu0 0.0
        %1417 = vmatprep.subr.mxu0 0.0
        %1418 = vmatpush1.msra.mxu0 %v1386
        %1419 = vmatprep.subr.mxu0 0.0
        %1420 = vmatpush2.msra.mxu0 0.0
        %1421 = vmatprep.subr.mxu0 0.0
        %1422 = vmatpush2.msra.mxu0 0.0
        %1423 = vmatprep.subr.mxu0 0.0
        %1424 = vmatpush2.msra.mxu0 0.0
        %1425 = vmatprep.subr.mxu0 0.0
        %1426 = vmatpush2.msra.mxu0 0.0
        %1427 = vmatprep.subr.mxu0 0.0
        %1428 = vmatpush2.msra.mxu0 0.0
        %1429 = vmatprep.subr.mxu0 0.0
        %1430 = vmatpush2.msra.mxu0 0.0
        %1431 = vmatprep.subr.mxu0 0.0
        %1432 = vmatpush2.msra.mxu0 0.0
        %1433 = vmatprep.subr.mxu0 0.0
        %1434 = vmatpush2.msra.mxu0 0.0
        %1435 = vmatprep.subr.mxu0 0.0
        %1436 = vmatpush2.msra.mxu0 0.0
        %1437 = vmatprep.subr.mxu0 0.0
        %1438 = vmatpush2.msra.mxu0 0.0
        %1439 = vmatprep.subr.mxu0 0.0
        %1440 = vmatpush2.msra.mxu0 0.0
        %1441 = vmatprep.subr.mxu0 0.0
        %1442 = vmatpush2.msra.mxu0 0.0
        %1443 = vmatprep.subr.mxu0 0.0
        %1444 = vmatpush2.msra.mxu0 0.0
        %1445 = vmatprep.subr.mxu0 0.0
        %1446 = vmatpush2.msra.mxu0 0.0
        %1447 = vmatprep.subr.mxu0 0.0
        %1448 = vmatpush2.msra.mxu0 0.0
        %1449 = vmatprep.subr.mxu0 0.0
        %1450 = vmatpush2.msra.mxu0 0.0
        %1451 = vmatprep.mubr.f32.mxu0 0.0
        %1452 = vmatmul.mubr.f32.gmra.mxu0 %v550
        %v1453 = vpop.f32.mrf.mxu0
        %v1454 = vadd.f32 0.0, %v1453
        %v1455 = vpop.f32.mrf.mxu0
        %1456 = vdwg.mxu0
        %v1457 = vmul.f32 %v1454, %v625
        %v1458 = vadd.f32 %v1457, 1e-05
        %v1459 = vrsqrt.pop %v1458
        %1460 = vrot.lane.b32.xlu0 %v1126, 127
        %v1461 = vpop.permute.xlu0 %1460
        %v1463 = vmul.f32 %v1459, %v1461
        %v1464 = vmul.f32 %v1368, %v1463
        %1466 = vrot.lane.b32.xlu0 %v1464, 2
        %v1467 = vpop.permute.xlu0 %1466
        %v1469 = vsub.f32 %v1126, %v1467
        %1471 = vset.pattern.permute.xlu0 0
        %1472 = vperm.xlu0 %1471, %v1463
        %v1473 = vpop.permute.xlu0 %1472
        %v1475 = vmul.f32 %v1291, %v1473
        %v1476 = vmul.f32 %v1292, %v1473
        %v1477 = vmul.f32 %v1293, %v1473
        %1479 = vset.pattern.permute.xlu0 2
        %1480 = vperm.xlu0 %1479, %v1469
        %v1481 = vpop.permute.xlu0 %1480
        %v1483 = vadd.f32 %v1475, %v1481
        %v1484 = vadd.f32 %v1476, %v1481
        %v1485 = vadd.f32 %v1477, %v1481
        %v1486 = vmax.f32 %v1483, 0.0
        %v1487 = vmax.f32 %v1484, 0.0
        %v1488 = vmax.f32 %v1485, 0.0
        %v1489 = vmul.f32 %v1486, %v321
        %v1490 = vmul.f32 %v1487, %v325
        %v1491 = vmul.f32 %v1488, %v329
        %1492 = vrot.lane.b32.xlu0 %v1489, 18
        %v1493 = vpop.permute.xlu0 %1492
        %1494 = vrot.lane.b32.xlu0 %v1490, 18
        %v1495 = vpop.permute.xlu0 %1494
        %1496 = vrot.lane.b32.xlu0 %v1491, 18
        %v1497 = vpop.permute.xlu0 %1496
        %v1498 = vsel %vm363, %v1495, %v1497
        %v1499 = vsel %vm363, %v1493, %v1495
        %v1500 = vsel %vm363, %v1497, %v1493
        %1501 = vrot.lane.b32.xlu0 %v1489, 110
        %v1502 = vpop.permute.xlu0 %1501
        %1503 = vrot.lane.b32.xlu0 %v1490, 110
        %v1504 = vpop.permute.xlu0 %1503
        %1505 = vrot.lane.b32.xlu0 %v1491, 110
        %v1506 = vpop.permute.xlu0 %1505
        %v1507 = vsel %vm373, %v1504, %v1506
        %v1508 = vsel %vm373, %v1502, %v1504
        %v1509 = vsel %vm373, %v1506, %v1502
        %v1510 = vpack.c.bf16 %v1489, %v1500
        %v1511 = vpack.c.bf16 %v1490, %v1499
        %v1512 = vpack.c.bf16 %v1491, %v1498
        %v1513 = vpack.c.bf16 %v1508, %v1508
        %v1514 = vpack.c.bf16 %v1507, %v1507
        %v1515 = vpack.c.bf16 %v1509, %v1509
        %v1517 = vsel %vm398, %v1513, 0
        %v1520 = vsel %vm398, %v1514, 0
        %v1523 = vsel %vm398, %v1515, 0
        %1525 = vmatprep.subr.bf16.mxu0 0
        %1526 = vmatpush1.bf16.msra.mxu0 0
        %1527 = vmatprep.subr.bf16.mxu0 0
        %1528 = vmatpush1.bf16.msra.mxu0 0
        %1529 = vmatprep.subr.bf16.mxu0 0
        %1530 = vmatpush1.bf16.msra.mxu0 0
        %1531 = vmatprep.subr.bf16.mxu0 0
        %1532 = vmatpush1.bf16.msra.mxu0 0
        %1533 = vmatprep.subr.bf16.mxu0 0
        %1534 = vmatpush1.bf16.msra.mxu0 0
        %1535 = vmatprep.subr.bf16.mxu0 0
        %1536 = vmatpush1.bf16.msra.mxu0 0
        %1537 = vmatprep.subr.bf16.mxu0 %v1520
        %1538 = vmatpush1.bf16.msra.mxu0 %v1517
        %1539 = vmatprep.subr.bf16.mxu0 %v1511
        %1540 = vmatpush1.bf16.msra.mxu0 %v1510
        %1541 = vmatprep.subr.bf16.mxu0 0
        %1542 = vmatpush2.bf16.msra.mxu0 0
        %1543 = vmatprep.subr.bf16.mxu0 0
        %1544 = vmatpush2.bf16.msra.mxu0 0
        %1545 = vmatprep.subr.bf16.mxu0 0
        %1546 = vmatpush2.bf16.msra.mxu0 0
        %1547 = vmatprep.subr.bf16.mxu0 0
        %1548 = vmatpush2.bf16.msra.mxu0 0
        %1549 = vmatprep.subr.bf16.mxu0 0
        %1550 = vmatpush2.bf16.msra.mxu0 0
        %1551 = vmatprep.subr.bf16.mxu0 0
        %1552 = vmatpush2.bf16.msra.mxu0 0
        %1553 = vmatprep.subr.bf16.mxu0 0
        %1554 = vmatpush2.bf16.msra.mxu0 0
        %1555 = vmatprep.subr.bf16.mxu0 0
        %1556 = vmatpush2.bf16.msra.mxu0 0
        %1557 = vmatprep.mubr.bf16.mxu0 0
        %1558 = vmatmul.mubr.bf16.gmra.mxu0 %v783
        %v1559 = vpop.f32.mrf.mxu0
        %v1560 = vadd.f32 0.0, %v1559
        %v1561 = vpop.f32.mrf.mxu0
        %v1562 = vadd.f32 0.0, %v1561
        %v1563 = vpop.f32.mrf.mxu0
        %v1564 = vadd.f32 0.0, %v1563
        %v1565 = vpop.f32.mrf.mxu0
        %v1566 = vadd.f32 0.0, %v1565
        %1567 = vmatprep.mubr.bf16.mxu0 0
        %1568 = vmatmul.mubr.bf16.gmra.mxu0 %v786
        %v1569 = vpop.f32.mrf.mxu0
        %v1570 = vadd.f32 0.0, %v1569
        %v1571 = vpop.f32.mrf.mxu0
        %v1572 = vadd.f32 0.0, %v1571
        %v1573 = vpop.f32.mrf.mxu0
        %v1574 = vpop.f32.mrf.mxu0
        %1575 = vdwg.mxu0
        %1576 = vmatprep.subr.bf16.mxu0 0
        %1577 = vmatpush1.bf16.msra.mxu0 0
        %1578 = vmatprep.subr.bf16.mxu0 0
        %1579 = vmatpush1.bf16.msra.mxu0 0
        %1580 = vmatprep.subr.bf16.mxu0 0
        %1581 = vmatpush1.bf16.msra.mxu0 0
        %1582 = vmatprep.subr.bf16.mxu0 0
        %1583 = vmatpush1.bf16.msra.mxu0 0
        %1584 = vmatprep.subr.bf16.mxu0 0
        %1585 = vmatpush1.bf16.msra.mxu0 0
        %1586 = vmatprep.subr.bf16.mxu0 0
        %1587 = vmatpush1.bf16.msra.mxu0 0
        %1588 = vmatprep.subr.bf16.mxu0 0
        %1589 = vmatpush1.bf16.msra.mxu0 %v1523
        %1590 = vmatprep.subr.bf16.mxu0 0
        %1591 = vmatpush1.bf16.msra.mxu0 %v1512
        %1592 = vmatprep.subr.bf16.mxu0 0
        %1593 = vmatpush2.bf16.msra.mxu0 0
        %1594 = vmatprep.subr.bf16.mxu0 0
        %1595 = vmatpush2.bf16.msra.mxu0 0
        %1596 = vmatprep.subr.bf16.mxu0 0
        %1597 = vmatpush2.bf16.msra.mxu0 0
        %1598 = vmatprep.subr.bf16.mxu0 0
        %1599 = vmatpush2.bf16.msra.mxu0 0
        %1600 = vmatprep.subr.bf16.mxu0 0
        %1601 = vmatpush2.bf16.msra.mxu0 0
        %1602 = vmatprep.subr.bf16.mxu0 0
        %1603 = vmatpush2.bf16.msra.mxu0 0
        %1604 = vmatprep.subr.bf16.mxu0 0
        %1605 = vmatpush2.bf16.msra.mxu0 0
        %1606 = vmatprep.subr.bf16.mxu0 0
        %1607 = vmatpush2.bf16.msra.mxu0 0
        %1608 = vmatprep.mubr.bf16.mxu0 0
        %1609 = vmatmul.mubr.bf16.gmra.mxu0 %v783
        %v1610 = vpop.f32.mrf.mxu0
        %v1611 = vadd.f32 0.0, %v1610
        %v1612 = vpop.f32.mrf.mxu0
        %v1613 = vpop.f32.mrf.mxu0
        %v1614 = vadd.f32 0.0, %v1613
        %v1615 = vpop.f32.mrf.mxu0
        %1616 = vmatprep.mubr.bf16.mxu0 0
        %1617 = vmatmul.mubr.bf16.gmra.mxu0 %v786
        %v1618 = vpop.f32.mrf.mxu0
        %v1619 = vadd.f32 0.0, %v1618
        %v1620 = vpop.f32.mrf.mxu0
        %v1621 = vpop.f32.mrf.mxu0
        %v1622 = vpop.f32.mrf.mxu0
        %1623 = vdwg.mxu0
        %1624 = vrot.lane.b32.xlu0 %v1560, 1
        %v1625 = vpop.permute.xlu0 %1624
        %1626 = vrot.lane.b32.xlu0 %v1562, 1
        %v1627 = vpop.permute.xlu0 %1626
        %1628 = vrot.lane.b32.xlu0 %v1611, 1
        %v1629 = vpop.permute.xlu0 %1628
        %v1630 = vsel %vm513, %v1627, %v1629
        %v1631 = vsel %vm513, %v1625, %v1627
        %v1632 = vsel %vm513, %v1629, %v1625
        %v1633 = vadd.f32 %v1632, %v1564
        %v1634 = vadd.f32 %v1631, %v1566
        %v1635 = vadd.f32 %v1630, %v1614
        %1636 = vrot.lane.b32.xlu0 %v1570, 127
        %v1637 = vpop.permute.xlu0 %1636
        %1638 = vrot.lane.b32.xlu0 %v1572, 127
        %v1639 = vpop.permute.xlu0 %1638
        %1640 = vrot.lane.b32.xlu0 %v1619, 127
        %v1641 = vpop.permute.xlu0 %1640
        %v1642 = vsel %vm526, %v1639, %v1641
        %v1643 = vsel %vm526, %v1637, %v1639
        %v1644 = vsel %vm526, %v1641, %v1637
        %v1645 = vadd.f32 %v1633, %v1643
        %v1646 = vadd.f32 %v1634, %v1642
        %v1647 = vadd.f32 %v1635, %v1644
        %v1648 = vmul.f32 %v1645, %v321
        %v1649 = vmul.f32 %v1646, %v325
        %v1650 = vmul.f32 %v1647, %v329
        %v1651 = vadd.f32 %v1648, %v1649
        %v1652 = vadd.f32 %v1651, %v1650
        %1653 = vadd.xlane.f32.xlu0 %v1652
        %v1654 = vpop.xlane.xlu0 %1653
        %1655 = vmatprep.subr.mxu0 0.0
        %1656 = vmatpush1.msra.mxu0 0.0
        %1657 = vmatprep.subr.mxu0 0.0
        %1658 = vmatpush1.msra.mxu0 0.0
        %1659 = vmatprep.subr.mxu0 0.0
        %1660 = vmatpush1.msra.mxu0 0.0
        %1661 = vmatprep.subr.mxu0 0.0
        %1662 = vmatpush1.msra.mxu0 0.0
        %1663 = vmatprep.subr.mxu0 0.0
        %1664 = vmatpush1.msra.mxu0 0.0
        %1665 = vmatprep.subr.mxu0 0.0
        %1666 = vmatpush1.msra.mxu0 0.0
        %1667 = vmatprep.subr.mxu0 0.0
        %1668 = vmatpush1.msra.mxu0 0.0
        %1669 = vmatprep.subr.mxu0 0.0
        %1670 = vmatpush1.msra.mxu0 0.0
        %1671 = vmatprep.subr.mxu0 0.0
        %1672 = vmatpush1.msra.mxu0 0.0
        %1673 = vmatprep.subr.mxu0 0.0
        %1674 = vmatpush1.msra.mxu0 0.0
        %1675 = vmatprep.subr.mxu0 0.0
        %1676 = vmatpush1.msra.mxu0 0.0
        %1677 = vmatprep.subr.mxu0 0.0
        %1678 = vmatpush1.msra.mxu0 0.0
        %1679 = vmatprep.subr.mxu0 0.0
        %1680 = vmatpush1.msra.mxu0 0.0
        %1681 = vmatprep.subr.mxu0 0.0
        %1682 = vmatpush1.msra.mxu0 0.0
        %1683 = vmatprep.subr.mxu0 0.0
        %1684 = vmatpush1.msra.mxu0 0.0
        %1685 = vmatprep.subr.mxu0 0.0
        %1686 = vmatpush1.msra.mxu0 %v1654
        %1687 = vmatprep.subr.mxu0 0.0
        %1688 = vmatpush2.msra.mxu0 0.0
        %1689 = vmatprep.subr.mxu0 0.0
        %1690 = vmatpush2.msra.mxu0 0.0
        %1691 = vmatprep.subr.mxu0 0.0
        %1692 = vmatpush2.msra.mxu0 0.0
        %1693 = vmatprep.subr.mxu0 0.0
        %1694 = vmatpush2.msra.mxu0 0.0
        %1695 = vmatprep.subr.mxu0 0.0
        %1696 = vmatpush2.msra.mxu0 0.0
        %1697 = vmatprep.subr.mxu0 0.0
        %1698 = vmatpush2.msra.mxu0 0.0
        %1699 = vmatprep.subr.mxu0 0.0
        %1700 = vmatpush2.msra.mxu0 0.0
        %1701 = vmatprep.subr.mxu0 0.0
        %1702 = vmatpush2.msra.mxu0 0.0
        %1703 = vmatprep.subr.mxu0 0.0
        %1704 = vmatpush2.msra.mxu0 0.0
        %1705 = vmatprep.subr.mxu0 0.0
        %1706 = vmatpush2.msra.mxu0 0.0
        %1707 = vmatprep.subr.mxu0 0.0
        %1708 = vmatpush2.msra.mxu0 0.0
        %1709 = vmatprep.subr.mxu0 0.0
        %1710 = vmatpush2.msra.mxu0 0.0
        %1711 = vmatprep.subr.mxu0 0.0
        %1712 = vmatpush2.msra.mxu0 0.0
        %1713 = vmatprep.subr.mxu0 0.0
        %1714 = vmatpush2.msra.mxu0 0.0
        %1715 = vmatprep.subr.mxu0 0.0
        %1716 = vmatpush2.msra.mxu0 0.0
        %1717 = vmatprep.subr.mxu0 0.0
        %1718 = vmatpush2.msra.mxu0 0.0
        %1719 = vmatprep.mubr.f32.mxu0 0.0
        %1720 = vmatmul.mubr.f32.gmra.mxu0 %v550
        %v1721 = vpop.f32.mrf.mxu0
        %v1722 = vadd.f32 0.0, %v1721
        %v1723 = vpop.f32.mrf.mxu0
        %1724 = vdwg.mxu0
        %v1725 = vmul.f32 %v1722, %v625
        %1727 = vset.pattern.permute.xlu0 0
        %1728 = vperm.xlu0 %1727, %v1725
        %v1729 = vpop.permute.xlu0 %1728
        %v1731 = vsub.f32 %v1648, %v1729
        %v1732 = vsub.f32 %v1649, %v1729
        %v1733 = vsub.f32 %v1650, %v1729
        %v1734 = vmul.f32 %v1731, %v321
        %v1735 = vmul.f32 %v1732, %v325
        %v1736 = vmul.f32 %v1733, %v329
        %v1737 = vmul.f32 %v1734, %v1734
        %v1738 = vmul.f32 %v1735, %v1735
        %v1739 = vmul.f32 %v1736, %v1736
        %v1740 = vadd.f32 %v1737, %v1738
        %v1741 = vadd.f32 %v1740, %v1739
        %1742 = vadd.xlane.f32.xlu0 %v1741
        %v1743 = vpop.xlane.xlu0 %1742
        %1744 = vmatprep.subr.mxu0 0.0
        %1745 = vmatpush1.msra.mxu0 0.0
        %1746 = vmatprep.subr.mxu0 0.0
        %1747 = vmatpush1.msra.mxu0 0.0
        %1748 = vmatprep.subr.mxu0 0.0
        %1749 = vmatpush1.msra.mxu0 0.0
        %1750 = vmatprep.subr.mxu0 0.0
        %1751 = vmatpush1.msra.mxu0 0.0
        %1752 = vmatprep.subr.mxu0 0.0
        %1753 = vmatpush1.msra.mxu0 0.0
        %1754 = vmatprep.subr.mxu0 0.0
        %1755 = vmatpush1.msra.mxu0 0.0
        %1756 = vmatprep.subr.mxu0 0.0
        %1757 = vmatpush1.msra.mxu0 0.0
        %1758 = vmatprep.subr.mxu0 0.0
        %1759 = vmatpush1.msra.mxu0 0.0
        %1760 = vmatprep.subr.mxu0 0.0
        %1761 = vmatpush1.msra.mxu0 0.0
        %1762 = vmatprep.subr.mxu0 0.0
        %1763 = vmatpush1.msra.mxu0 0.0
        %1764 = vmatprep.subr.mxu0 0.0
        %1765 = vmatpush1.msra.mxu0 0.0
        %1766 = vmatprep.subr.mxu0 0.0
        %1767 = vmatpush1.msra.mxu0 0.0
        %1768 = vmatprep.subr.mxu0 0.0
        %1769 = vmatpush1.msra.mxu0 0.0
        %1770 = vmatprep.subr.mxu0 0.0
        %1771 = vmatpush1.msra.mxu0 0.0
        %1772 = vmatprep.subr.mxu0 0.0
        %1773 = vmatpush1.msra.mxu0 0.0
        %1774 = vmatprep.subr.mxu0 0.0
        %1775 = vmatpush1.msra.mxu0 %v1743
        %1776 = vmatprep.subr.mxu0 0.0
        %1777 = vmatpush2.msra.mxu0 0.0
        %1778 = vmatprep.subr.mxu0 0.0
        %1779 = vmatpush2.msra.mxu0 0.0
        %1780 = vmatprep.subr.mxu0 0.0
        %1781 = vmatpush2.msra.mxu0 0.0
        %1782 = vmatprep.subr.mxu0 0.0
        %1783 = vmatpush2.msra.mxu0 0.0
        %1784 = vmatprep.subr.mxu0 0.0
        %1785 = vmatpush2.msra.mxu0 0.0
        %1786 = vmatprep.subr.mxu0 0.0
        %1787 = vmatpush2.msra.mxu0 0.0
        %1788 = vmatprep.subr.mxu0 0.0
        %1789 = vmatpush2.msra.mxu0 0.0
        %1790 = vmatprep.subr.mxu0 0.0
        %1791 = vmatpush2.msra.mxu0 0.0
        %1792 = vmatprep.subr.mxu0 0.0
        %1793 = vmatpush2.msra.mxu0 0.0
        %1794 = vmatprep.subr.mxu0 0.0
        %1795 = vmatpush2.msra.mxu0 0.0
        %1796 = vmatprep.subr.mxu0 0.0
        %1797 = vmatpush2.msra.mxu0 0.0
        %1798 = vmatprep.subr.mxu0 0.0
        %1799 = vmatpush2.msra.mxu0 0.0
        %1800 = vmatprep.subr.mxu0 0.0
        %1801 = vmatpush2.msra.mxu0 0.0
        %1802 = vmatprep.subr.mxu0 0.0
        %1803 = vmatpush2.msra.mxu0 0.0
        %1804 = vmatprep.subr.mxu0 0.0
        %1805 = vmatpush2.msra.mxu0 0.0
        %1806 = vmatprep.subr.mxu0 0.0
        %1807 = vmatpush2.msra.mxu0 0.0
        %1808 = vmatprep.mubr.f32.mxu0 0.0
        %1809 = vmatmul.mubr.f32.gmra.mxu0 %v550
        %v1810 = vpop.f32.mrf.mxu0
        %v1811 = vadd.f32 0.0, %v1810
        %v1812 = vpop.f32.mrf.mxu0
        %1813 = vdwg.mxu0
        %v1814 = vmul.f32 %v1811, %v625
        %v1815 = vadd.f32 %v1814, 1e-05
        %v1816 = vrsqrt.pop %v1815
        %v1817 = vmul.f32 %v1816, %v1090
        %v1818 = vmul.f32 %v1725, %v1817
        %1820 = vrot.lane.b32.xlu0 %v1818, 9
        %v1821 = vpop.permute.xlu0 %1820
        %v1823 = vsub.f32 %v316, %v1821
        %1825 = vset.pattern.permute.xlu0 0
        %1826 = vperm.xlu0 %1825, %v1817
        %v1827 = vpop.permute.xlu0 %1826
        %v1829 = vmul.f32 %v1648, %v1827
        %v1830 = vmul.f32 %v1649, %v1827
        %v1831 = vmul.f32 %v1650, %v1827
        %v1832 = vadd.f32 %v1122, %v1829
        %v1833 = vadd.f32 %v1123, %v1830
        %v1834 = vadd.f32 %v1124, %v1831
        %1836 = vset.pattern.permute.xlu0 9
        %1837 = vperm.xlu0 %1836, %v1823
        %v1838 = vpop.permute.xlu0 %1837
        %v1840 = vadd.f32 %v1832, %v1838
        %v1841 = vadd.f32 %v1833, %v1838
        %v1842 = vadd.f32 %v1834, %v1838
        %s1843 = scalar_lea.vmem %s310, 24 [#allocation10]
        %1844 = vst [vmem:[%s1843] sm:$0xff] %v1840
        %1845 = vst [vmem:[%s1843 + $0x8] sm:$0xff] %v1841
        %1846 = vst [vmem:[%s1843 + $0x10] sm:$0xff] %v1842
        %s1847 = sand.u32 %s149, 1
        %s1848 = scalar_lea.sflag [#allocation4], %s1847
        %s1849 = sand.u32 %s149, 1
        %s1850 = smul.addr %s1849, 48
        %s1851 = scalar_lea.vmem [#allocation10], %s1850
        // Predicated region
        $region57: #{tpu_custom_call.1} parent=39 // pred_check
          %p1852 = pneg %p159
        $region58: #{tpu_custom_call.1} parent=39 // pred_check_branch
          %1854 = sbr.rel (%p1852) target = $region60
        $region59: #{tpu_custom_call.1} parent=39 // pred_region
          %s1855 = smul.u32 2, %s26
          %s1857 = ssub.s32 768, 768
          %1858 = vsyncadd %s1848, %s1857
          %s1859 = smul.addr %s1855, 3
          %s1860 = smul.addr %s1859, 128
          %s1861 = scalar_lea.hbm %s5, %s1860
          %s1862 = sshll.u32 %s1851, 4
          %s1863 = int_to_ptr.vmem [resolvable:$true] %s1862
          %1868 = dma.vmem_to_hbm [thread:$0]  %s1863, 768, %s1861, %s1848, 384, 384, 24
        $region60: #{tpu_custom_call.1} parent=39 // pred_fallthru
          _
      $region40: #{tpu_custom_call.1} parent=5 // pred_fallthru
        _
      %p1869 = scmp.le.s32.totalorder 2, %s21
      // Predicated region
      $region61: #{tpu_custom_call.1} parent=5 // pred_check
        %p1870 = pneg %p1869
      $region62: #{tpu_custom_call.1} parent=5 // pred_check_branch
        %1872 = sbr.rel (%p1870) target = $region64
      $region63: #{tpu_custom_call.1} parent=5 // pred_region
        %s1873 = ssub.s32 %s21, 2
        // Predicated region
        $region65: #{tpu_custom_call.1} parent=63 // pred_check
          %p1874 = pneg %p165
        $region66: #{tpu_custom_call.1} parent=63 // pred_check_branch
          %1876 = sbr.rel (%p1874) target = $region68
        $region67: #{tpu_custom_call.1} parent=63 // pred_region
          %s1877 = sand.u32 %s150, 1
          %s1878 = scalar_lea.sflag [#allocation4], %s1877
          %s1879 = sand.u32 %s150, 1
          %s1880 = smul.addr %s1879, 48
          %s1881 = scalar_lea.vmem [#allocation10], %s1880
          %1882 = dma.done %s1878, 768
        $region68: #{tpu_custom_call.1} parent=63 // pred_fallthru
          _
      $region64: #{tpu_custom_call.1} parent=5 // pred_fallthru
        _
    $region6: #{tpu_custom_call.1} parent=1 // loop_footer
      %s25 = sadd.s32 1, %s21
    $region7: #{tpu_custom_call.1} parent=1 // loop_footer_branch
      %20 = sbr.rel target = $region3
    $region8: #{tpu_custom_call.1} parent=1 // loop_exit
      _
    %1883 = vsyncpa [#allocation3], 1
    %s1884 = scalar_lea.sflag [#allocation3], 1
    %1885 = vsyncpa %s1884, 1
    %1886 = vsyncpa [#allocation6], 1
    %s1887 = scalar_lea.sflag [#allocation6], 1
    %1888 = vsyncpa %s1887, 1
    %1889 = vsyncpa [#allocation9], 1
    %1890 = vsyncpa [#allocation4], 1
    %s1891 = scalar_lea.sflag [#allocation4], 1
    %1892 = vsyncpa %s1891, 1

</llo_original>
